<compile_context>
chip_gen: v5e
topology: v5e:2x2
jax: 0.10.0
libtpu: 0.0.40
codegen_flags: <defaults>
</compile_context>

<pallas_src>
import functools

import jax
import jax.numpy as jnp
import numpy as np
from jax import lax
from jax.experimental import pallas as pl
from jax.experimental.pallas import tpu as pltpu

_RING = 8  # DMA-semaphore ring depth for the state write-back scatter


def _adap_mm_kernel(margin, gamma, inv_b, tm, ring,
                    row_ref, maskrow_ref, col_ref, idx_ref, u_state_in,
                    contrib_ref, u_state_out,
                    u_new_ref, sem):
    del u_state_in  # aliased with u_state_out (same HBM buffer)

    tile = pl.program_id(0)
    row0 = tile * tm

    pred_row = row_ref[...]                      # (1, B)   mat_data over columns
    mask_row = maskrow_ref[...]                  # (1, B)   pos_mask over columns
    cols = col_ref[...]                          # (TM, 4)  [pred, mask, u_all, u_pos]
    pred_col = cols[:, 0:1]
    mask_col = cols[:, 1:2]
    u_all_old = cols[:, 2:3]
    u_pos_old = cols[:, 3:4]

    # O(B^2) path: margin hoisted into the (1,B) row -> one subtract + max + square.
    row_pm = pred_row + margin                   # (1, B)
    diff = row_pm - pred_col                     # (TM, B) == margin - (pred_i - pred_j)
    sur = jnp.maximum(diff, 0.0)
    sur = sur * sur

    # Exact-f32 row reductions on the XLU (no multi-pass MXU algorithm needed).
    s_all = jnp.sum(sur, axis=1, keepdims=True)              # (TM, 1)  sum_j sur
    s_pos = jnp.sum(sur * mask_row, axis=1, keepdims=True)   # (TM, 1)  sum_j mask_j*sur

    # Moving-average state update (detached in torch; forward only).
    u_all_new = (1.0 - gamma) * u_all_old + gamma * (s_all * inv_b)
    u_pos_new = (1.0 - gamma) * u_pos_old + gamma * (s_pos * inv_b)

    # sum_j p[i,j]*sur[i,j] = (u_pos_new*S - u_all_new*SP) / u_all_new^2, positive rows only.
    # "+ (1 - mask)" keeps masked / padded rows finite (their weight is exactly 0).
    den = u_all_new * u_all_new + (1.0 - mask_col)
    w = mask_col / den                                        # (TM, 1)
    contrib_ref[...] = w * (u_pos_new * s_all - u_all_new * s_pos)

    # Stage the packed per-row state update: one 8-byte DMA per touched row.
    u_new_ref[...] = jnp.concatenate([u_all_new, u_pos_new], axis=1)   # (TM, 2)

    def scatter_row(i, carry):
        slot = i % ring
        # SMEM reads happen before any .wait() (avoids the sst->sld forwarding stall).
        idx = idx_ref[row0 + i]                               # < 0  =>  not a positive row
        prev = idx_ref[row0 + jnp.maximum(i - ring, 0)]

        @pl.when(jnp.logical_and(i >= ring, prev >= 0))
        def _():
            # Retire the copy issued `ring` rows ago on this slot (same 8-byte size).
            pltpu.make_async_copy(u_new_ref.at[pl.ds(0, 1)],
                                  u_state_out.at[pl.ds(0, 1)],
                                  sem.at[slot]).wait()

        @pl.when(idx >= 0)
        def _():
            # Fire-and-forget; the matching wait happens `ring` rows later or in the drain.
            pltpu.make_async_copy(u_new_ref.at[pl.ds(i, 1)],
                                  u_state_out.at[pl.ds(idx, 1)],
                                  sem.at[slot]).start()
        return carry

    lax.fori_loop(0, tm, scatter_row, 0, unroll=8)

    # Drain the (at most `ring`) still-outstanding copies before this tile finishes.
    for r in range(max(tm - ring, 0), tm):
        @pl.when(idx_ref[row0 + r] >= 0)
        def _():
            pltpu.make_async_copy(u_new_ref.at[pl.ds(0, 1)],
                                  u_state_out.at[pl.ds(0, 1)],
                                  sem.at[r % ring]).wait()


def _choose_tm(b):
    """Row-tile size: keep the per-step (TM,B) footprint <= ~24 MiB, TM multiple of 8."""
    tm = 512
    while tm > 8 and 3 * tm * b * 4 > (24 << 20):
        tm //= 2
    b8 = ((b + 7) // 8) * 8
    return min(tm, b8)


@functools.partial(jax.jit, static_argnums=(4, 5), donate_argnums=(3,))
def adap_mm_forward(y_pred_adv, y_true, index_s, u_state, margin, gamma):
    """Functional AdAP_MM.forward.

    u_state is the packed (data_length, 2) float32 moving-average state [u_all | u_pos]
    (torch module's self.u_all / self.u_pos as columns).  It is donated and updated in
    place via input_output_aliases; keep using the returned array.  Returns
    (loss, new_u_state).
    """
    preds = jnp.reshape(y_pred_adv, (-1,)).astype(jnp.float32)
    b = preds.shape[0]
    labels = jnp.reshape(y_true, (-1,))
    pos_mask = (labels == 1).astype(jnp.float32)

    flat_idx = jnp.reshape(index_s, (-1,)).astype(jnp.int32)
    # negative index == "row is not a positive sample; kernel must not write state back"
    scatter_idx = jnp.where(labels == 1, flat_idx, -1).astype(jnp.int32)

    # O(B) gather of the touched state rows; the write-back happens inside the kernel.
    u_gathered = u_state[flat_idx].astype(jnp.float32)        # (B, 2)

    tm = _choose_tm(b)
    b_pad = ((b + tm - 1) // tm) * tm
    pad = b_pad - b

    pred_row = preds.reshape(1, b)                            # lane-dense, resident
    mask_row = pos_mask.reshape(1, b)                         # resident
    col_slab = jnp.concatenate(
        [preds[:, None], pos_mask[:, None], u_gathered], axis=1)      # (B, 4)
    if pad:
        col_slab = jnp.pad(col_slab, ((0, pad), (0, 0)))
        scatter_idx = jnp.pad(scatter_idx, (0, pad), constant_values=-1)

    kernel = functools.partial(_adap_mm_kernel, float(margin), float(gamma),
                               1.0 / b, tm, _RING)

    # Always set the scoped-VMEM limit explicitly (v5e default is only 16 MiB) and keep
    # headroom below physical capacity (64 MiB per TensorCore on v7x).
    try:
        vmem_cap = int(pltpu.get_tpu_info().vmem_capacity_bytes)
    except Exception:
        vmem_cap = 64 << 20
    vmem_need = 3 * tm * b * 4 + (2 << 20)
    vmem_limit = int(min(max(vmem_need, 16 << 20), int(vmem_cap * 0.85)))

    smem = pltpu.MemorySpace.SMEM
    data_length = u_state.shape[0]

    contrib, u_state_out = pl.pallas_call(
        kernel,
        out_shape=(jax.ShapeDtypeStruct((b_pad, 1), jnp.float32),
                   jax.ShapeDtypeStruct((data_length, 2), jnp.float32)),
        grid=(b_pad // tm,),
        in_specs=[pl.BlockSpec((1, b), lambda i: (0, 0)),     # pred row   (resident)
                  pl.BlockSpec((1, b), lambda i: (0, 0)),     # mask row   (resident)
                  pl.BlockSpec((tm, 4), lambda i: (i, 0)),    # per-tile column slab
                  pl.BlockSpec(memory_space=smem),            # scatter indices (SMEM)
                  pl.BlockSpec(memory_space=pl.ANY)],         # u_state in HBM (aliased)
        out_specs=(pl.BlockSpec((tm, 1), lambda i: (i, 0)),   # per-row loss contribution
                   pl.BlockSpec(memory_space=pl.ANY)),        # u_state out (aliased)
        scratch_shapes=[pltpu.VMEM((tm, 2), jnp.float32),     # staged [u_all_new|u_pos_new]
                        pltpu.SemaphoreType.DMA((_RING,))],   # write-back DMA ring
        input_output_aliases={4: 1},                          # in-place u_state update
        compiler_params=pltpu.CompilerParams(
            dimension_semantics=("parallel",),
            vmem_limit_bytes=vmem_limit),
    )(pred_row, mask_row, col_slab, scatter_idx, u_state)

    # Final 1/(P*B) scale in the wrapper (P is a global quantity once the kernel is tiled).
    num_pos = jnp.sum(pos_mask)                               # NaN/Inf if 0, as in torch
    loss = jnp.sum(contrib) / (num_pos * b)
    return loss, u_state_out


def _reference_numpy(y_pred, y_true, index_s, u_all, u_pos, margin, gamma):
    """Line-by-line NumPy port of the PyTorch forward (for correctness check)."""
    y_pred = np.asarray(y_pred, dtype=np.float64).reshape(-1)
    y_true = np.asarray(y_true).reshape(-1)
    index_s = np.asarray(index_s).reshape(-1)
    u_all = np.array(u_all, dtype=np.float64, copy=True)
    u_pos = np.array(u_pos, dtype=np.float64, copy=True)

    f_ps = y_pred[y_true == 1].reshape(-1, 1)
    index_ps = index_s[y_true == 1].reshape(-1)
    mat_data = np.tile(y_pred.reshape(1, -1), (len(f_ps), 1))
    pos_mask = (y_true == 1).astype(np.float64).reshape(-1)
    sur_loss = np.maximum(margin - (f_ps - mat_data), 0.0) ** 2
    pos_sur_loss = sur_loss * pos_mask
    u_all[index_ps] = (1 - gamma) * u_all[index_ps] + gamma * sur_loss.mean(1, keepdims=True)
    u_pos[index_ps] = (1 - gamma) * u_pos[index_ps] + gamma * pos_sur_loss.mean(1, keepdims=True)
    p = (u_pos[index_ps] - u_all[index_ps] * pos_mask) / u_all[index_ps] ** 2
    loss = np.mean(p * sur_loss)
    return loss, u_all, u_pos


if __name__ == "__main__":
    margin = 1.0
    gamma = 0.9
    data_length = 64
    B = 8

    key = jax.random.PRNGKey(0)
    k_pred, k_lbl, k_idx = jax.random.split(key, 3)

    y_pred_adv = jax.random.normal(k_pred, (B, 1), dtype=jnp.float32)
    y_true = jax.random.bernoulli(k_lbl, 0.5, (B, 1)).astype(jnp.int32)
    y_true = y_true.at[0, 0].set(1)  # guarantee at least one positive
    index_s = jax.random.permutation(k_idx, data_length)[:B].astype(jnp.int32)

    # torch ctor state: zeros of shape (data_length, 1) each; packed here as (data_length, 2).
    # Keep host copies for the reference check -- the device copy is donated into the kernel.
    u_state0_np = np.zeros((data_length, 2), dtype=np.float32)
    y_pred_np = np.asarray(y_pred_adv)
    y_true_np = np.asarray(y_true)
    index_np = np.asarray(index_s)

    loss, u_state1 = adap_mm_forward(
        y_pred_adv, y_true, index_s, jnp.asarray(u_state0_np), margin, gamma)
    jax.block_until_ready((loss, u_state1))

    # correctness check against a float64 NumPy port of the torch forward
    ref_loss, ref_u_all, ref_u_pos = _reference_numpy(
        y_pred_np, y_true_np, index_np,
        u_state0_np[:, 0:1], u_state0_np[:, 1:2], margin, gamma)

    u_state1_np = np.asarray(u_state1)
    np.testing.assert_allclose(float(loss), ref_loss, rtol=1e-4, atol=1e-6)
    np.testing.assert_allclose(u_state1_np[:, 0:1], ref_u_all, rtol=1e-4, atol=1e-6)
    np.testing.assert_allclose(u_state1_np[:, 1:2], ref_u_pos, rtol=1e-4, atol=1e-6)

    print("KERNEL_OK")
</pallas_src>

<mosaic_0001>
module attributes {stable_mosaic.version = 11 : i64} {
  func.func @_adap_mm_kernel(%arg0: i32, %arg1: memref<1x8xf32, #tpu.memory_space<vmem>>, %arg2: memref<1x8xf32, #tpu.memory_space<vmem>>, %arg3: memref<8x4xf32, #tpu.memory_space<vmem>>, %arg4: memref<8xi32, #tpu.memory_space<smem>>, %arg5: memref<64x2xf32, #tpu.memory_space<any>>, %arg6: memref<8x1xf32, #tpu.memory_space<vmem>>, %arg7: memref<64x2xf32, #tpu.memory_space<any>>, %arg8: memref<8x2xf32, #tpu.memory_space<vmem>>, %arg9: memref<8x!tpu.dma_semaphore, #tpu.memory_space<semaphore_mem>>) attributes {dimension_semantics = [#tpu.dimension_semantics<parallel>], iteration_bounds = array<i64: 1>, scalar_prefetch = 0 : i64, scratch_operands = 2 : i64, tpu.core_type = #tpu.core_type<tc>, window_params = [{pipeline_mode = #tpu.pipeline_mode<synchronous>, transform_indices = @transform_0, window_bounds = array<i64: 1, 8>}, {pipeline_mode = #tpu.pipeline_mode<synchronous>, transform_indices = @transform_1, window_bounds = array<i64: 1, 8>}, {transform_indices = @transform_2, window_bounds = array<i64: 8, 4>}, {transform_indices = @transform_3, window_bounds = array<i64: 8>}, {}, {transform_indices = @transform_5, window_bounds = array<i64: 8, 1>}, {}]} {
    %c8_i32 = arith.constant 8 : i32
    %0 = arith.muli %arg0, %c8_i32 : i32
    %c0 = arith.constant 0 : index
    %c0_0 = arith.constant 0 : index
    %1 = vector.load %arg1[%c0, %c0_0] : memref<1x8xf32, #tpu.memory_space<vmem>>, vector<1x8xf32>
    %c0_1 = arith.constant 0 : index
    %c0_2 = arith.constant 0 : index
    %2 = vector.load %arg2[%c0_1, %c0_2] : memref<1x8xf32, #tpu.memory_space<vmem>>, vector<1x8xf32>
    %c0_3 = arith.constant 0 : index
    %c0_4 = arith.constant 0 : index
    %3 = vector.load %arg3[%c0_3, %c0_4] : memref<8x4xf32, #tpu.memory_space<vmem>>, vector<8x4xf32>
    %4 = vector.extract_strided_slice %3 {offsets = [0, 0], sizes = [8, 1], strides = [1, 1]} : vector<8x4xf32> to vector<8x1xf32>
    %5 = vector.extract_strided_slice %3 {offsets = [0, 1], sizes = [8, 1], strides = [1, 1]} : vector<8x4xf32> to vector<8x1xf32>
    %6 = vector.extract_strided_slice %3 {offsets = [0, 2], sizes = [8, 1], strides = [1, 1]} : vector<8x4xf32> to vector<8x1xf32>
    %7 = vector.extract_strided_slice %3 {offsets = [0, 3], sizes = [8, 1], strides = [1, 1]} : vector<8x4xf32> to vector<8x1xf32>
    %cst = arith.constant 1.000000e+00 : f32
    %8 = vector.broadcast %cst : f32 to vector<1x8xf32>
    %9 = arith.addf %1, %8 : vector<1x8xf32>
    %10 = vector.broadcast %9 : vector<1x8xf32> to vector<8x8xf32>
    %11 = vector.broadcast %4 : vector<8x1xf32> to vector<8x8xf32>
    %12 = arith.subf %10, %11 : vector<8x8xf32>
    %cst_5 = arith.constant 0.000000e+00 : f32
    %13 = vector.broadcast %cst_5 : f32 to vector<8x8xf32>
    %14 = arith.maximumf %12, %13 : vector<8x8xf32>
    %15 = arith.mulf %14, %14 : vector<8x8xf32>
    %cst_6 = arith.constant dense<0.000000e+00> : vector<8xf32>
    %16 = vector.multi_reduction <add>, %15, %cst_6 [1] : vector<8x8xf32> to vector<8xf32>
    %17 = vector.shape_cast %16 : vector<8xf32> to vector<8x1xf32>
    %18 = vector.broadcast %2 : vector<1x8xf32> to vector<8x8xf32>
    %19 = arith.mulf %15, %18 : vector<8x8xf32>
    %cst_7 = arith.constant dense<0.000000e+00> : vector<8xf32>
    %20 = vector.multi_reduction <add>, %19, %cst_7 [1] : vector<8x8xf32> to vector<8xf32>
    %21 = vector.shape_cast %20 : vector<8xf32> to vector<8x1xf32>
    %cst_8 = arith.constant 1.000000e-01 : f32
    %22 = vector.broadcast %cst_8 : f32 to vector<8x1xf32>
    %23 = arith.mulf %22, %6 : vector<8x1xf32>
    %cst_9 = arith.constant 1.250000e-01 : f32
    %24 = vector.broadcast %cst_9 : f32 to vector<8x1xf32>
    %25 = arith.mulf %17, %24 : vector<8x1xf32>
    %cst_10 = arith.constant 0.899999976 : f32
    %26 = vector.broadcast %cst_10 : f32 to vector<8x1xf32>
    %27 = arith.mulf %26, %25 : vector<8x1xf32>
    %28 = arith.addf %23, %27 : vector<8x1xf32>
    %cst_11 = arith.constant 1.000000e-01 : f32
    %29 = vector.broadcast %cst_11 : f32 to vector<8x1xf32>
    %30 = arith.mulf %29, %7 : vector<8x1xf32>
    %cst_12 = arith.constant 1.250000e-01 : f32
    %31 = vector.broadcast %cst_12 : f32 to vector<8x1xf32>
    %32 = arith.mulf %21, %31 : vector<8x1xf32>
    %cst_13 = arith.constant 0.899999976 : f32
    %33 = vector.broadcast %cst_13 : f32 to vector<8x1xf32>
    %34 = arith.mulf %33, %32 : vector<8x1xf32>
    %35 = arith.addf %30, %34 : vector<8x1xf32>
    %36 = arith.mulf %28, %28 : vector<8x1xf32>
    %cst_14 = arith.constant 1.000000e+00 : f32
    %37 = vector.broadcast %cst_14 : f32 to vector<8x1xf32>
    %38 = arith.subf %37, %5 : vector<8x1xf32>
    %39 = arith.addf %36, %38 : vector<8x1xf32>
    %40 = arith.divf %5, %39 : vector<8x1xf32>
    %41 = arith.mulf %35, %17 : vector<8x1xf32>
    %42 = arith.mulf %28, %21 : vector<8x1xf32>
    %43 = arith.subf %41, %42 : vector<8x1xf32>
    %44 = arith.mulf %40, %43 : vector<8x1xf32>
    %c0_15 = arith.constant 0 : index
    %c0_16 = arith.constant 0 : index
    %45 = vector.load %arg6[%c0_15, %c0_16] : memref<8x1xf32, #tpu.memory_space<vmem>>, vector<8x1xf32>
    tpu.vector_store %arg6[%c0_15, %c0_16], %44 {strides = array<i32>} : memref<8x1xf32, #tpu.memory_space<vmem>>, vector<8x1xf32>,
    %46 = tpu.concatenate %28, %35 in 1 : vector<8x1xf32>, vector<8x1xf32> -> vector<8x2xf32>
    %c0_17 = arith.constant 0 : index
    %c0_18 = arith.constant 0 : index
    %47 = vector.load %arg8[%c0_17, %c0_18] : memref<8x2xf32, #tpu.memory_space<vmem>>, vector<8x2xf32>
    tpu.vector_store %arg8[%c0_17, %c0_18], %46 {strides = array<i32>} : memref<8x2xf32, #tpu.memory_space<vmem>>, vector<8x2xf32>,
    %c0_i32 = arith.constant 0 : i32
    %c8_i32_19 = arith.constant 8 : i32
    %c0_i32_20 = arith.constant 0 : i32
    %48 = arith.cmpi eq, %c8_i32_19, %c0_i32_20 : i32
    %c1_i32 = arith.constant 1 : i32
    %49 = arith.select %48, %c1_i32, %c8_i32_19 : i32
    %50 = arith.remsi %c0_i32, %49 : i32
    %c0_i32_21 = arith.constant 0 : i32
    %51 = arith.cmpi ne, %50, %c0_i32_21 : i32
    %c0_i32_22 = arith.constant 0 : i32
    %52 = arith.cmpi slt, %50, %c0_i32_22 : i32
    %c0_i32_23 = arith.constant 0 : i32
    %53 = arith.cmpi slt, %49, %c0_i32_23 : i32
    %54 = arith.xori %52, %53 : i1
    %55 = arith.andi %54, %51 : i1
    %56 = arith.addi %50, %49 : i32
    %57 = arith.select %55, %56, %50 : i32
    %58 = arith.addi %0, %c0_i32 : i32
    %59 = arith.index_cast %58 : i32 to index
    %60 = memref.load %arg4[%59] : memref<8xi32, #tpu.memory_space<smem>>
    %c8_i32_24 = arith.constant 8 : i32
    %61 = arith.subi %c0_i32, %c8_i32_24 : i32
    %c0_i32_25 = arith.constant 0 : i32
    %62 = arith.maxsi %61, %c0_i32_25 : i32
    %63 = arith.addi %0, %62 : i32
    %64 = arith.index_cast %63 : i32 to index
    %65 = memref.load %arg4[%64] : memref<8xi32, #tpu.memory_space<smem>>
    %c8_i32_26 = arith.constant 8 : i32
    %66 = arith.cmpi sge, %c0_i32, %c8_i32_26 : i32
    %c0_i32_27 = arith.constant 0 : i32
    %67 = arith.cmpi sge, %65, %c0_i32_27 : i32
    %68 = arith.andi %66, %67 : i1
    %69 = arith.extui %68 : i1 to i32
    %c0_i32_28 = arith.constant 0 : i32
    %70 = arith.cmpi ne, %69, %c0_i32_28 : i32
    scf.if %70 {
      %c0_i32_148 = arith.constant 0 : i32
      %c0_i32_149 = arith.constant 0 : i32
      %304 = tpu.memref_slice %arg8[%c0_i32_148, %c0_i32_149] : memref<8x2xf32, #tpu.memory_space<vmem>> -> memref<1x2xf32, #tpu.memory_space<vmem>>
      %c0_i32_150 = arith.constant 0 : i32
      %c0_i32_151 = arith.constant 0 : i32
      %305 = tpu.memref_slice %arg7[%c0_i32_150, %c0_i32_151] : memref<64x2xf32, #tpu.memory_space<any>> -> memref<1x2xf32, #tpu.memory_space<any>>
      %306 = tpu.memref_slice %arg9[%57] : memref<8x!tpu.dma_semaphore, #tpu.memory_space<semaphore_mem>> -> memref<1x!tpu.dma_semaphore, #tpu.memory_space<semaphore_mem>>
      %307 = tpu.memref_squeeze %306 : memref<1x!tpu.dma_semaphore, #tpu.memory_space<semaphore_mem>> -> memref<!tpu.dma_semaphore, #tpu.memory_space<semaphore_mem>>
      tpu.wait_dma2 semaphore(%307 : memref<!tpu.dma_semaphore, #tpu.memory_space<semaphore_mem>>) src(%304 : memref<1x2xf32, #tpu.memory_space<vmem>>) dst(%305 : memref<1x2xf32, #tpu.memory_space<any>>)
    } else {
    }
    %c0_i32_29 = arith.constant 0 : i32
    %71 = arith.cmpi sge, %60, %c0_i32_29 : i32
    %72 = arith.extui %71 : i1 to i32
    %c0_i32_30 = arith.constant 0 : i32
    %73 = arith.cmpi ne, %72, %c0_i32_30 : i32
    scf.if %73 {
      %c0_i32_148 = arith.constant 0 : i32
      %304 = tpu.memref_slice %arg8[%c0_i32, %c0_i32_148] : memref<8x2xf32, #tpu.memory_space<vmem>> -> memref<1x2xf32, #tpu.memory_space<vmem>>
      %c0_i32_149 = arith.constant 0 : i32
      %305 = tpu.memref_slice %arg7[%60, %c0_i32_149] : memref<64x2xf32, #tpu.memory_space<any>> -> memref<1x2xf32, #tpu.memory_space<any>>
      %306 = tpu.memref_slice %arg9[%57] : memref<8x!tpu.dma_semaphore, #tpu.memory_space<semaphore_mem>> -> memref<1x!tpu.dma_semaphore, #tpu.memory_space<semaphore_mem>>
      %307 = tpu.memref_squeeze %306 : memref<1x!tpu.dma_semaphore, #tpu.memory_space<semaphore_mem>> -> memref<!tpu.dma_semaphore, #tpu.memory_space<semaphore_mem>>
      tpu.enqueue_dma source(%304 : memref<1x2xf32, #tpu.memory_space<vmem>>) target(%305 : memref<1x2xf32, #tpu.memory_space<any>>) target_semaphore(%307 : memref<!tpu.dma_semaphore, #tpu.memory_space<semaphore_mem>>)
    } else {
    }
    %c1_i32_31 = arith.constant 1 : i32
    %c8_i32_32 = arith.constant 8 : i32
    %c0_i32_33 = arith.constant 0 : i32
    %74 = arith.cmpi eq, %c8_i32_32, %c0_i32_33 : i32
    %c1_i32_34 = arith.constant 1 : i32
    %75 = arith.select %74, %c1_i32_34, %c8_i32_32 : i32
    %76 = arith.remsi %c1_i32_31, %75 : i32
    %c0_i32_35 = arith.constant 0 : i32
    %77 = arith.cmpi ne, %76, %c0_i32_35 : i32
    %c0_i32_36 = arith.constant 0 : i32
    %78 = arith.cmpi slt, %76, %c0_i32_36 : i32
    %c0_i32_37 = arith.constant 0 : i32
    %79 = arith.cmpi slt, %75, %c0_i32_37 : i32
    %80 = arith.xori %78, %79 : i1
    %81 = arith.andi %80, %77 : i1
    %82 = arith.addi %76, %75 : i32
    %83 = arith.select %81, %82, %76 : i32
    %84 = arith.addi %0, %c1_i32_31 : i32
    %85 = arith.index_cast %84 : i32 to index
    %86 = memref.load %arg4[%85] : memref<8xi32, #tpu.memory_space<smem>>
    %c8_i32_38 = arith.constant 8 : i32
    %87 = arith.subi %c1_i32_31, %c8_i32_38 : i32
    %c0_i32_39 = arith.constant 0 : i32
    %88 = arith.maxsi %87, %c0_i32_39 : i32
    %89 = arith.addi %0, %88 : i32
    %90 = arith.index_cast %89 : i32 to index
    %91 = memref.load %arg4[%90] : memref<8xi32, #tpu.memory_space<smem>>
    %c8_i32_40 = arith.constant 8 : i32
    %92 = arith.cmpi sge, %c1_i32_31, %c8_i32_40 : i32
    %c0_i32_41 = arith.constant 0 : i32
    %93 = arith.cmpi sge, %91, %c0_i32_41 : i32
    %94 = arith.andi %92, %93 : i1
    %95 = arith.extui %94 : i1 to i32
    %c0_i32_42 = arith.constant 0 : i32
    %96 = arith.cmpi ne, %95, %c0_i32_42 : i32
    scf.if %96 {
      %c0_i32_148 = arith.constant 0 : i32
      %c0_i32_149 = arith.constant 0 : i32
      %304 = tpu.memref_slice %arg8[%c0_i32_148, %c0_i32_149] : memref<8x2xf32, #tpu.memory_space<vmem>> -> memref<1x2xf32, #tpu.memory_space<vmem>>
      %c0_i32_150 = arith.constant 0 : i32
      %c0_i32_151 = arith.constant 0 : i32
      %305 = tpu.memref_slice %arg7[%c0_i32_150, %c0_i32_151] : memref<64x2xf32, #tpu.memory_space<any>> -> memref<1x2xf32, #tpu.memory_space<any>>
      %306 = tpu.memref_slice %arg9[%83] : memref<8x!tpu.dma_semaphore, #tpu.memory_space<semaphore_mem>> -> memref<1x!tpu.dma_semaphore, #tpu.memory_space<semaphore_mem>>
      %307 = tpu.memref_squeeze %306 : memref<1x!tpu.dma_semaphore, #tpu.memory_space<semaphore_mem>> -> memref<!tpu.dma_semaphore, #tpu.memory_space<semaphore_mem>>
      tpu.wait_dma2 semaphore(%307 : memref<!tpu.dma_semaphore, #tpu.memory_space<semaphore_mem>>) src(%304 : memref<1x2xf32, #tpu.memory_space<vmem>>) dst(%305 : memref<1x2xf32, #tpu.memory_space<any>>)
    } else {
    }
    %c0_i32_43 = arith.constant 0 : i32
    %97 = arith.cmpi sge, %86, %c0_i32_43 : i32
    %98 = arith.extui %97 : i1 to i32
    %c0_i32_44 = arith.constant 0 : i32
    %99 = arith.cmpi ne, %98, %c0_i32_44 : i32
    scf.if %99 {
      %c0_i32_148 = arith.constant 0 : i32
      %304 = tpu.memref_slice %arg8[%c1_i32_31, %c0_i32_148] : memref<8x2xf32, #tpu.memory_space<vmem>> -> memref<1x2xf32, #tpu.memory_space<vmem>>
      %c0_i32_149 = arith.constant 0 : i32
      %305 = tpu.memref_slice %arg7[%86, %c0_i32_149] : memref<64x2xf32, #tpu.memory_space<any>> -> memref<1x2xf32, #tpu.memory_space<any>>
      %306 = tpu.memref_slice %arg9[%83] : memref<8x!tpu.dma_semaphore, #tpu.memory_space<semaphore_mem>> -> memref<1x!tpu.dma_semaphore, #tpu.memory_space<semaphore_mem>>
      %307 = tpu.memref_squeeze %306 : memref<1x!tpu.dma_semaphore, #tpu.memory_space<semaphore_mem>> -> memref<!tpu.dma_semaphore, #tpu.memory_space<semaphore_mem>>
      tpu.enqueue_dma source(%304 : memref<1x2xf32, #tpu.memory_space<vmem>>) target(%305 : memref<1x2xf32, #tpu.memory_space<any>>) target_semaphore(%307 : memref<!tpu.dma_semaphore, #tpu.memory_space<semaphore_mem>>)
    } else {
    }
    %c2_i32 = arith.constant 2 : i32
    %c8_i32_45 = arith.constant 8 : i32
    %c0_i32_46 = arith.constant 0 : i32
    %100 = arith.cmpi eq, %c8_i32_45, %c0_i32_46 : i32
    %c1_i32_47 = arith.constant 1 : i32
    %101 = arith.select %100, %c1_i32_47, %c8_i32_45 : i32
    %102 = arith.remsi %c2_i32, %101 : i32
    %c0_i32_48 = arith.constant 0 : i32
    %103 = arith.cmpi ne, %102, %c0_i32_48 : i32
    %c0_i32_49 = arith.constant 0 : i32
    %104 = arith.cmpi slt, %102, %c0_i32_49 : i32
    %c0_i32_50 = arith.constant 0 : i32
    %105 = arith.cmpi slt, %101, %c0_i32_50 : i32
    %106 = arith.xori %104, %105 : i1
    %107 = arith.andi %106, %103 : i1
    %108 = arith.addi %102, %101 : i32
    %109 = arith.select %107, %108, %102 : i32
    %110 = arith.addi %0, %c2_i32 : i32
    %111 = arith.index_cast %110 : i32 to index
    %112 = memref.load %arg4[%111] : memref<8xi32, #tpu.memory_space<smem>>
    %c8_i32_51 = arith.constant 8 : i32
    %113 = arith.subi %c2_i32, %c8_i32_51 : i32
    %c0_i32_52 = arith.constant 0 : i32
    %114 = arith.maxsi %113, %c0_i32_52 : i32
    %115 = arith.addi %0, %114 : i32
    %116 = arith.index_cast %115 : i32 to index
    %117 = memref.load %arg4[%116] : memref<8xi32, #tpu.memory_space<smem>>
    %c8_i32_53 = arith.constant 8 : i32
    %118 = arith.cmpi sge, %c2_i32, %c8_i32_53 : i32
    %c0_i32_54 = arith.constant 0 : i32
    %119 = arith.cmpi sge, %117, %c0_i32_54 : i32
    %120 = arith.andi %118, %119 : i1
    %121 = arith.extui %120 : i1 to i32
    %c0_i32_55 = arith.constant 0 : i32
    %122 = arith.cmpi ne, %121, %c0_i32_55 : i32
    scf.if %122 {
      %c0_i32_148 = arith.constant 0 : i32
      %c0_i32_149 = arith.constant 0 : i32
      %304 = tpu.memref_slice %arg8[%c0_i32_148, %c0_i32_149] : memref<8x2xf32, #tpu.memory_space<vmem>> -> memref<1x2xf32, #tpu.memory_space<vmem>>
      %c0_i32_150 = arith.constant 0 : i32
      %c0_i32_151 = arith.constant 0 : i32
      %305 = tpu.memref_slice %arg7[%c0_i32_150, %c0_i32_151] : memref<64x2xf32, #tpu.memory_space<any>> -> memref<1x2xf32, #tpu.memory_space<any>>
      %306 = tpu.memref_slice %arg9[%109] : memref<8x!tpu.dma_semaphore, #tpu.memory_space<semaphore_mem>> -> memref<1x!tpu.dma_semaphore, #tpu.memory_space<semaphore_mem>>
      %307 = tpu.memref_squeeze %306 : memref<1x!tpu.dma_semaphore, #tpu.memory_space<semaphore_mem>> -> memref<!tpu.dma_semaphore, #tpu.memory_space<semaphore_mem>>
      tpu.wait_dma2 semaphore(%307 : memref<!tpu.dma_semaphore, #tpu.memory_space<semaphore_mem>>) src(%304 : memref<1x2xf32, #tpu.memory_space<vmem>>) dst(%305 : memref<1x2xf32, #tpu.memory_space<any>>)
    } else {
    }
    %c0_i32_56 = arith.constant 0 : i32
    %123 = arith.cmpi sge, %112, %c0_i32_56 : i32
    %124 = arith.extui %123 : i1 to i32
    %c0_i32_57 = arith.constant 0 : i32
    %125 = arith.cmpi ne, %124, %c0_i32_57 : i32
    scf.if %125 {
      %c0_i32_148 = arith.constant 0 : i32
      %304 = tpu.memref_slice %arg8[%c2_i32, %c0_i32_148] : memref<8x2xf32, #tpu.memory_space<vmem>> -> memref<1x2xf32, #tpu.memory_space<vmem>>
      %c0_i32_149 = arith.constant 0 : i32
      %305 = tpu.memref_slice %arg7[%112, %c0_i32_149] : memref<64x2xf32, #tpu.memory_space<any>> -> memref<1x2xf32, #tpu.memory_space<any>>
      %306 = tpu.memref_slice %arg9[%109] : memref<8x!tpu.dma_semaphore, #tpu.memory_space<semaphore_mem>> -> memref<1x!tpu.dma_semaphore, #tpu.memory_space<semaphore_mem>>
      %307 = tpu.memref_squeeze %306 : memref<1x!tpu.dma_semaphore, #tpu.memory_space<semaphore_mem>> -> memref<!tpu.dma_semaphore, #tpu.memory_space<semaphore_mem>>
      tpu.enqueue_dma source(%304 : memref<1x2xf32, #tpu.memory_space<vmem>>) target(%305 : memref<1x2xf32, #tpu.memory_space<any>>) target_semaphore(%307 : memref<!tpu.dma_semaphore, #tpu.memory_space<semaphore_mem>>)
    } else {
    }
    %c3_i32 = arith.constant 3 : i32
    %c8_i32_58 = arith.constant 8 : i32
    %c0_i32_59 = arith.constant 0 : i32
    %126 = arith.cmpi eq, %c8_i32_58, %c0_i32_59 : i32
    %c1_i32_60 = arith.constant 1 : i32
    %127 = arith.select %126, %c1_i32_60, %c8_i32_58 : i32
    %128 = arith.remsi %c3_i32, %127 : i32
    %c0_i32_61 = arith.constant 0 : i32
    %129 = arith.cmpi ne, %128, %c0_i32_61 : i32
    %c0_i32_62 = arith.constant 0 : i32
    %130 = arith.cmpi slt, %128, %c0_i32_62 : i32
    %c0_i32_63 = arith.constant 0 : i32
    %131 = arith.cmpi slt, %127, %c0_i32_63 : i32
    %132 = arith.xori %130, %131 : i1
    %133 = arith.andi %132, %129 : i1
    %134 = arith.addi %128, %127 : i32
    %135 = arith.select %133, %134, %128 : i32
    %136 = arith.addi %0, %c3_i32 : i32
    %137 = arith.index_cast %136 : i32 to index
    %138 = memref.load %arg4[%137] : memref<8xi32, #tpu.memory_space<smem>>
    %c8_i32_64 = arith.constant 8 : i32
    %139 = arith.subi %c3_i32, %c8_i32_64 : i32
    %c0_i32_65 = arith.constant 0 : i32
    %140 = arith.maxsi %139, %c0_i32_65 : i32
    %141 = arith.addi %0, %140 : i32
    %142 = arith.index_cast %141 : i32 to index
    %143 = memref.load %arg4[%142] : memref<8xi32, #tpu.memory_space<smem>>
    %c8_i32_66 = arith.constant 8 : i32
    %144 = arith.cmpi sge, %c3_i32, %c8_i32_66 : i32
    %c0_i32_67 = arith.constant 0 : i32
    %145 = arith.cmpi sge, %143, %c0_i32_67 : i32
    %146 = arith.andi %144, %145 : i1
    %147 = arith.extui %146 : i1 to i32
    %c0_i32_68 = arith.constant 0 : i32
    %148 = arith.cmpi ne, %147, %c0_i32_68 : i32
    scf.if %148 {
      %c0_i32_148 = arith.constant 0 : i32
      %c0_i32_149 = arith.constant 0 : i32
      %304 = tpu.memref_slice %arg8[%c0_i32_148, %c0_i32_149] : memref<8x2xf32, #tpu.memory_space<vmem>> -> memref<1x2xf32, #tpu.memory_space<vmem>>
      %c0_i32_150 = arith.constant 0 : i32
      %c0_i32_151 = arith.constant 0 : i32
      %305 = tpu.memref_slice %arg7[%c0_i32_150, %c0_i32_151] : memref<64x2xf32, #tpu.memory_space<any>> -> memref<1x2xf32, #tpu.memory_space<any>>
      %306 = tpu.memref_slice %arg9[%135] : memref<8x!tpu.dma_semaphore, #tpu.memory_space<semaphore_mem>> -> memref<1x!tpu.dma_semaphore, #tpu.memory_space<semaphore_mem>>
      %307 = tpu.memref_squeeze %306 : memref<1x!tpu.dma_semaphore, #tpu.memory_space<semaphore_mem>> -> memref<!tpu.dma_semaphore, #tpu.memory_space<semaphore_mem>>
      tpu.wait_dma2 semaphore(%307 : memref<!tpu.dma_semaphore, #tpu.memory_space<semaphore_mem>>) src(%304 : memref<1x2xf32, #tpu.memory_space<vmem>>) dst(%305 : memref<1x2xf32, #tpu.memory_space<any>>)
    } else {
    }
    %c0_i32_69 = arith.constant 0 : i32
    %149 = arith.cmpi sge, %138, %c0_i32_69 : i32
    %150 = arith.extui %149 : i1 to i32
    %c0_i32_70 = arith.constant 0 : i32
    %151 = arith.cmpi ne, %150, %c0_i32_70 : i32
    scf.if %151 {
      %c0_i32_148 = arith.constant 0 : i32
      %304 = tpu.memref_slice %arg8[%c3_i32, %c0_i32_148] : memref<8x2xf32, #tpu.memory_space<vmem>> -> memref<1x2xf32, #tpu.memory_space<vmem>>
      %c0_i32_149 = arith.constant 0 : i32
      %305 = tpu.memref_slice %arg7[%138, %c0_i32_149] : memref<64x2xf32, #tpu.memory_space<any>> -> memref<1x2xf32, #tpu.memory_space<any>>
      %306 = tpu.memref_slice %arg9[%135] : memref<8x!tpu.dma_semaphore, #tpu.memory_space<semaphore_mem>> -> memref<1x!tpu.dma_semaphore, #tpu.memory_space<semaphore_mem>>
      %307 = tpu.memref_squeeze %306 : memref<1x!tpu.dma_semaphore, #tpu.memory_space<semaphore_mem>> -> memref<!tpu.dma_semaphore, #tpu.memory_space<semaphore_mem>>
      tpu.enqueue_dma source(%304 : memref<1x2xf32, #tpu.memory_space<vmem>>) target(%305 : memref<1x2xf32, #tpu.memory_space<any>>) target_semaphore(%307 : memref<!tpu.dma_semaphore, #tpu.memory_space<semaphore_mem>>)
    } else {
    }
    %c4_i32 = arith.constant 4 : i32
    %c8_i32_71 = arith.constant 8 : i32
    %c0_i32_72 = arith.constant 0 : i32
    %152 = arith.cmpi eq, %c8_i32_71, %c0_i32_72 : i32
    %c1_i32_73 = arith.constant 1 : i32
    %153 = arith.select %152, %c1_i32_73, %c8_i32_71 : i32
    %154 = arith.remsi %c4_i32, %153 : i32
    %c0_i32_74 = arith.constant 0 : i32
    %155 = arith.cmpi ne, %154, %c0_i32_74 : i32
    %c0_i32_75 = arith.constant 0 : i32
    %156 = arith.cmpi slt, %154, %c0_i32_75 : i32
    %c0_i32_76 = arith.constant 0 : i32
    %157 = arith.cmpi slt, %153, %c0_i32_76 : i32
    %158 = arith.xori %156, %157 : i1
    %159 = arith.andi %158, %155 : i1
    %160 = arith.addi %154, %153 : i32
    %161 = arith.select %159, %160, %154 : i32
    %162 = arith.addi %0, %c4_i32 : i32
    %163 = arith.index_cast %162 : i32 to index
    %164 = memref.load %arg4[%163] : memref<8xi32, #tpu.memory_space<smem>>
    %c8_i32_77 = arith.constant 8 : i32
    %165 = arith.subi %c4_i32, %c8_i32_77 : i32
    %c0_i32_78 = arith.constant 0 : i32
    %166 = arith.maxsi %165, %c0_i32_78 : i32
    %167 = arith.addi %0, %166 : i32
    %168 = arith.index_cast %167 : i32 to index
    %169 = memref.load %arg4[%168] : memref<8xi32, #tpu.memory_space<smem>>
    %c8_i32_79 = arith.constant 8 : i32
    %170 = arith.cmpi sge, %c4_i32, %c8_i32_79 : i32
    %c0_i32_80 = arith.constant 0 : i32
    %171 = arith.cmpi sge, %169, %c0_i32_80 : i32
    %172 = arith.andi %170, %171 : i1
    %173 = arith.extui %172 : i1 to i32
    %c0_i32_81 = arith.constant 0 : i32
    %174 = arith.cmpi ne, %173, %c0_i32_81 : i32
    scf.if %174 {
      %c0_i32_148 = arith.constant 0 : i32
      %c0_i32_149 = arith.constant 0 : i32
      %304 = tpu.memref_slice %arg8[%c0_i32_148, %c0_i32_149] : memref<8x2xf32, #tpu.memory_space<vmem>> -> memref<1x2xf32, #tpu.memory_space<vmem>>
      %c0_i32_150 = arith.constant 0 : i32
      %c0_i32_151 = arith.constant 0 : i32
      %305 = tpu.memref_slice %arg7[%c0_i32_150, %c0_i32_151] : memref<64x2xf32, #tpu.memory_space<any>> -> memref<1x2xf32, #tpu.memory_space<any>>
      %306 = tpu.memref_slice %arg9[%161] : memref<8x!tpu.dma_semaphore, #tpu.memory_space<semaphore_mem>> -> memref<1x!tpu.dma_semaphore, #tpu.memory_space<semaphore_mem>>
      %307 = tpu.memref_squeeze %306 : memref<1x!tpu.dma_semaphore, #tpu.memory_space<semaphore_mem>> -> memref<!tpu.dma_semaphore, #tpu.memory_space<semaphore_mem>>
      tpu.wait_dma2 semaphore(%307 : memref<!tpu.dma_semaphore, #tpu.memory_space<semaphore_mem>>) src(%304 : memref<1x2xf32, #tpu.memory_space<vmem>>) dst(%305 : memref<1x2xf32, #tpu.memory_space<any>>)
    } else {
    }
    %c0_i32_82 = arith.constant 0 : i32
    %175 = arith.cmpi sge, %164, %c0_i32_82 : i32
    %176 = arith.extui %175 : i1 to i32
    %c0_i32_83 = arith.constant 0 : i32
    %177 = arith.cmpi ne, %176, %c0_i32_83 : i32
    scf.if %177 {
      %c0_i32_148 = arith.constant 0 : i32
      %304 = tpu.memref_slice %arg8[%c4_i32, %c0_i32_148] : memref<8x2xf32, #tpu.memory_space<vmem>> -> memref<1x2xf32, #tpu.memory_space<vmem>>
      %c0_i32_149 = arith.constant 0 : i32
      %305 = tpu.memref_slice %arg7[%164, %c0_i32_149] : memref<64x2xf32, #tpu.memory_space<any>> -> memref<1x2xf32, #tpu.memory_space<any>>
      %306 = tpu.memref_slice %arg9[%161] : memref<8x!tpu.dma_semaphore, #tpu.memory_space<semaphore_mem>> -> memref<1x!tpu.dma_semaphore, #tpu.memory_space<semaphore_mem>>
      %307 = tpu.memref_squeeze %306 : memref<1x!tpu.dma_semaphore, #tpu.memory_space<semaphore_mem>> -> memref<!tpu.dma_semaphore, #tpu.memory_space<semaphore_mem>>
      tpu.enqueue_dma source(%304 : memref<1x2xf32, #tpu.memory_space<vmem>>) target(%305 : memref<1x2xf32, #tpu.memory_space<any>>) target_semaphore(%307 : memref<!tpu.dma_semaphore, #tpu.memory_space<semaphore_mem>>)
    } else {
    }
    %c5_i32 = arith.constant 5 : i32
    %c8_i32_84 = arith.constant 8 : i32
    %c0_i32_85 = arith.constant 0 : i32
    %178 = arith.cmpi eq, %c8_i32_84, %c0_i32_85 : i32
    %c1_i32_86 = arith.constant 1 : i32
    %179 = arith.select %178, %c1_i32_86, %c8_i32_84 : i32
    %180 = arith.remsi %c5_i32, %179 : i32
    %c0_i32_87 = arith.constant 0 : i32
    %181 = arith.cmpi ne, %180, %c0_i32_87 : i32
    %c0_i32_88 = arith.constant 0 : i32
    %182 = arith.cmpi slt, %180, %c0_i32_88 : i32
    %c0_i32_89 = arith.constant 0 : i32
    %183 = arith.cmpi slt, %179, %c0_i32_89 : i32
    %184 = arith.xori %182, %183 : i1
    %185 = arith.andi %184, %181 : i1
    %186 = arith.addi %180, %179 : i32
    %187 = arith.select %185, %186, %180 : i32
    %188 = arith.addi %0, %c5_i32 : i32
    %189 = arith.index_cast %188 : i32 to index
    %190 = memref.load %arg4[%189] : memref<8xi32, #tpu.memory_space<smem>>
    %c8_i32_90 = arith.constant 8 : i32
    %191 = arith.subi %c5_i32, %c8_i32_90 : i32
    %c0_i32_91 = arith.constant 0 : i32
    %192 = arith.maxsi %191, %c0_i32_91 : i32
    %193 = arith.addi %0, %192 : i32
    %194 = arith.index_cast %193 : i32 to index
    %195 = memref.load %arg4[%194] : memref<8xi32, #tpu.memory_space<smem>>
    %c8_i32_92 = arith.constant 8 : i32
    %196 = arith.cmpi sge, %c5_i32, %c8_i32_92 : i32
    %c0_i32_93 = arith.constant 0 : i32
    %197 = arith.cmpi sge, %195, %c0_i32_93 : i32
    %198 = arith.andi %196, %197 : i1
    %199 = arith.extui %198 : i1 to i32
    %c0_i32_94 = arith.constant 0 : i32
    %200 = arith.cmpi ne, %199, %c0_i32_94 : i32
    scf.if %200 {
      %c0_i32_148 = arith.constant 0 : i32
      %c0_i32_149 = arith.constant 0 : i32
      %304 = tpu.memref_slice %arg8[%c0_i32_148, %c0_i32_149] : memref<8x2xf32, #tpu.memory_space<vmem>> -> memref<1x2xf32, #tpu.memory_space<vmem>>
      %c0_i32_150 = arith.constant 0 : i32
      %c0_i32_151 = arith.constant 0 : i32
      %305 = tpu.memref_slice %arg7[%c0_i32_150, %c0_i32_151] : memref<64x2xf32, #tpu.memory_space<any>> -> memref<1x2xf32, #tpu.memory_space<any>>
      %306 = tpu.memref_slice %arg9[%187] : memref<8x!tpu.dma_semaphore, #tpu.memory_space<semaphore_mem>> -> memref<1x!tpu.dma_semaphore, #tpu.memory_space<semaphore_mem>>
      %307 = tpu.memref_squeeze %306 : memref<1x!tpu.dma_semaphore, #tpu.memory_space<semaphore_mem>> -> memref<!tpu.dma_semaphore, #tpu.memory_space<semaphore_mem>>
      tpu.wait_dma2 semaphore(%307 : memref<!tpu.dma_semaphore, #tpu.memory_space<semaphore_mem>>) src(%304 : memref<1x2xf32, #tpu.memory_space<vmem>>) dst(%305 : memref<1x2xf32, #tpu.memory_space<any>>)
    } else {
    }
    %c0_i32_95 = arith.constant 0 : i32
    %201 = arith.cmpi sge, %190, %c0_i32_95 : i32
    %202 = arith.extui %201 : i1 to i32
    %c0_i32_96 = arith.constant 0 : i32
    %203 = arith.cmpi ne, %202, %c0_i32_96 : i32
    scf.if %203 {
      %c0_i32_148 = arith.constant 0 : i32
      %304 = tpu.memref_slice %arg8[%c5_i32, %c0_i32_148] : memref<8x2xf32, #tpu.memory_space<vmem>> -> memref<1x2xf32, #tpu.memory_space<vmem>>
      %c0_i32_149 = arith.constant 0 : i32
      %305 = tpu.memref_slice %arg7[%190, %c0_i32_149] : memref<64x2xf32, #tpu.memory_space<any>> -> memref<1x2xf32, #tpu.memory_space<any>>
      %306 = tpu.memref_slice %arg9[%187] : memref<8x!tpu.dma_semaphore, #tpu.memory_space<semaphore_mem>> -> memref<1x!tpu.dma_semaphore, #tpu.memory_space<semaphore_mem>>
      %307 = tpu.memref_squeeze %306 : memref<1x!tpu.dma_semaphore, #tpu.memory_space<semaphore_mem>> -> memref<!tpu.dma_semaphore, #tpu.memory_space<semaphore_mem>>
      tpu.enqueue_dma source(%304 : memref<1x2xf32, #tpu.memory_space<vmem>>) target(%305 : memref<1x2xf32, #tpu.memory_space<any>>) target_semaphore(%307 : memref<!tpu.dma_semaphore, #tpu.memory_space<semaphore_mem>>)
    } else {
    }
    %c6_i32 = arith.constant 6 : i32
    %c8_i32_97 = arith.constant 8 : i32
    %c0_i32_98 = arith.constant 0 : i32
    %204 = arith.cmpi eq, %c8_i32_97, %c0_i32_98 : i32
    %c1_i32_99 = arith.constant 1 : i32
    %205 = arith.select %204, %c1_i32_99, %c8_i32_97 : i32
    %206 = arith.remsi %c6_i32, %205 : i32
    %c0_i32_100 = arith.constant 0 : i32
    %207 = arith.cmpi ne, %206, %c0_i32_100 : i32
    %c0_i32_101 = arith.constant 0 : i32
    %208 = arith.cmpi slt, %206, %c0_i32_101 : i32
    %c0_i32_102 = arith.constant 0 : i32
    %209 = arith.cmpi slt, %205, %c0_i32_102 : i32
    %210 = arith.xori %208, %209 : i1
    %211 = arith.andi %210, %207 : i1
    %212 = arith.addi %206, %205 : i32
    %213 = arith.select %211, %212, %206 : i32
    %214 = arith.addi %0, %c6_i32 : i32
    %215 = arith.index_cast %214 : i32 to index
    %216 = memref.load %arg4[%215] : memref<8xi32, #tpu.memory_space<smem>>
    %c8_i32_103 = arith.constant 8 : i32
    %217 = arith.subi %c6_i32, %c8_i32_103 : i32
    %c0_i32_104 = arith.constant 0 : i32
    %218 = arith.maxsi %217, %c0_i32_104 : i32
    %219 = arith.addi %0, %218 : i32
    %220 = arith.index_cast %219 : i32 to index
    %221 = memref.load %arg4[%220] : memref<8xi32, #tpu.memory_space<smem>>
    %c8_i32_105 = arith.constant 8 : i32
    %222 = arith.cmpi sge, %c6_i32, %c8_i32_105 : i32
    %c0_i32_106 = arith.constant 0 : i32
    %223 = arith.cmpi sge, %221, %c0_i32_106 : i32
    %224 = arith.andi %222, %223 : i1
    %225 = arith.extui %224 : i1 to i32
    %c0_i32_107 = arith.constant 0 : i32
    %226 = arith.cmpi ne, %225, %c0_i32_107 : i32
    scf.if %226 {
      %c0_i32_148 = arith.constant 0 : i32
      %c0_i32_149 = arith.constant 0 : i32
      %304 = tpu.memref_slice %arg8[%c0_i32_148, %c0_i32_149] : memref<8x2xf32, #tpu.memory_space<vmem>> -> memref<1x2xf32, #tpu.memory_space<vmem>>
      %c0_i32_150 = arith.constant 0 : i32
      %c0_i32_151 = arith.constant 0 : i32
      %305 = tpu.memref_slice %arg7[%c0_i32_150, %c0_i32_151] : memref<64x2xf32, #tpu.memory_space<any>> -> memref<1x2xf32, #tpu.memory_space<any>>
      %306 = tpu.memref_slice %arg9[%213] : memref<8x!tpu.dma_semaphore, #tpu.memory_space<semaphore_mem>> -> memref<1x!tpu.dma_semaphore, #tpu.memory_space<semaphore_mem>>
      %307 = tpu.memref_squeeze %306 : memref<1x!tpu.dma_semaphore, #tpu.memory_space<semaphore_mem>> -> memref<!tpu.dma_semaphore, #tpu.memory_space<semaphore_mem>>
      tpu.wait_dma2 semaphore(%307 : memref<!tpu.dma_semaphore, #tpu.memory_space<semaphore_mem>>) src(%304 : memref<1x2xf32, #tpu.memory_space<vmem>>) dst(%305 : memref<1x2xf32, #tpu.memory_space<any>>)
    } else {
    }
    %c0_i32_108 = arith.constant 0 : i32
    %227 = arith.cmpi sge, %216, %c0_i32_108 : i32
    %228 = arith.extui %227 : i1 to i32
    %c0_i32_109 = arith.constant 0 : i32
    %229 = arith.cmpi ne, %228, %c0_i32_109 : i32
    scf.if %229 {
      %c0_i32_148 = arith.constant 0 : i32
      %304 = tpu.memref_slice %arg8[%c6_i32, %c0_i32_148] : memref<8x2xf32, #tpu.memory_space<vmem>> -> memref<1x2xf32, #tpu.memory_space<vmem>>
      %c0_i32_149 = arith.constant 0 : i32
      %305 = tpu.memref_slice %arg7[%216, %c0_i32_149] : memref<64x2xf32, #tpu.memory_space<any>> -> memref<1x2xf32, #tpu.memory_space<any>>
      %306 = tpu.memref_slice %arg9[%213] : memref<8x!tpu.dma_semaphore, #tpu.memory_space<semaphore_mem>> -> memref<1x!tpu.dma_semaphore, #tpu.memory_space<semaphore_mem>>
      %307 = tpu.memref_squeeze %306 : memref<1x!tpu.dma_semaphore, #tpu.memory_space<semaphore_mem>> -> memref<!tpu.dma_semaphore, #tpu.memory_space<semaphore_mem>>
      tpu.enqueue_dma source(%304 : memref<1x2xf32, #tpu.memory_space<vmem>>) target(%305 : memref<1x2xf32, #tpu.memory_space<any>>) target_semaphore(%307 : memref<!tpu.dma_semaphore, #tpu.memory_space<semaphore_mem>>)
    } else {
    }
    %c7_i32 = arith.constant 7 : i32
    %c8_i32_110 = arith.constant 8 : i32
    %c0_i32_111 = arith.constant 0 : i32
    %230 = arith.cmpi eq, %c8_i32_110, %c0_i32_111 : i32
    %c1_i32_112 = arith.constant 1 : i32
    %231 = arith.select %230, %c1_i32_112, %c8_i32_110 : i32
    %232 = arith.remsi %c7_i32, %231 : i32
    %c0_i32_113 = arith.constant 0 : i32
    %233 = arith.cmpi ne, %232, %c0_i32_113 : i32
    %c0_i32_114 = arith.constant 0 : i32
    %234 = arith.cmpi slt, %232, %c0_i32_114 : i32
    %c0_i32_115 = arith.constant 0 : i32
    %235 = arith.cmpi slt, %231, %c0_i32_115 : i32
    %236 = arith.xori %234, %235 : i1
    %237 = arith.andi %236, %233 : i1
    %238 = arith.addi %232, %231 : i32
    %239 = arith.select %237, %238, %232 : i32
    %240 = arith.addi %0, %c7_i32 : i32
    %241 = arith.index_cast %240 : i32 to index
    %242 = memref.load %arg4[%241] : memref<8xi32, #tpu.memory_space<smem>>
    %c8_i32_116 = arith.constant 8 : i32
    %243 = arith.subi %c7_i32, %c8_i32_116 : i32
    %c0_i32_117 = arith.constant 0 : i32
    %244 = arith.maxsi %243, %c0_i32_117 : i32
    %245 = arith.addi %0, %244 : i32
    %246 = arith.index_cast %245 : i32 to index
    %247 = memref.load %arg4[%246] : memref<8xi32, #tpu.memory_space<smem>>
    %c8_i32_118 = arith.constant 8 : i32
    %248 = arith.cmpi sge, %c7_i32, %c8_i32_118 : i32
    %c0_i32_119 = arith.constant 0 : i32
    %249 = arith.cmpi sge, %247, %c0_i32_119 : i32
    %250 = arith.andi %248, %249 : i1
    %251 = arith.extui %250 : i1 to i32
    %c0_i32_120 = arith.constant 0 : i32
    %252 = arith.cmpi ne, %251, %c0_i32_120 : i32
    scf.if %252 {
      %c0_i32_148 = arith.constant 0 : i32
      %c0_i32_149 = arith.constant 0 : i32
      %304 = tpu.memref_slice %arg8[%c0_i32_148, %c0_i32_149] : memref<8x2xf32, #tpu.memory_space<vmem>> -> memref<1x2xf32, #tpu.memory_space<vmem>>
      %c0_i32_150 = arith.constant 0 : i32
      %c0_i32_151 = arith.constant 0 : i32
      %305 = tpu.memref_slice %arg7[%c0_i32_150, %c0_i32_151] : memref<64x2xf32, #tpu.memory_space<any>> -> memref<1x2xf32, #tpu.memory_space<any>>
      %306 = tpu.memref_slice %arg9[%239] : memref<8x!tpu.dma_semaphore, #tpu.memory_space<semaphore_mem>> -> memref<1x!tpu.dma_semaphore, #tpu.memory_space<semaphore_mem>>
      %307 = tpu.memref_squeeze %306 : memref<1x!tpu.dma_semaphore, #tpu.memory_space<semaphore_mem>> -> memref<!tpu.dma_semaphore, #tpu.memory_space<semaphore_mem>>
      tpu.wait_dma2 semaphore(%307 : memref<!tpu.dma_semaphore, #tpu.memory_space<semaphore_mem>>) src(%304 : memref<1x2xf32, #tpu.memory_space<vmem>>) dst(%305 : memref<1x2xf32, #tpu.memory_space<any>>)
    } else {
    }
    %c0_i32_121 = arith.constant 0 : i32
    %253 = arith.cmpi sge, %242, %c0_i32_121 : i32
    %254 = arith.extui %253 : i1 to i32
    %c0_i32_122 = arith.constant 0 : i32
    %255 = arith.cmpi ne, %254, %c0_i32_122 : i32
    scf.if %255 {
      %c0_i32_148 = arith.constant 0 : i32
      %304 = tpu.memref_slice %arg8[%c7_i32, %c0_i32_148] : memref<8x2xf32, #tpu.memory_space<vmem>> -> memref<1x2xf32, #tpu.memory_space<vmem>>
      %c0_i32_149 = arith.constant 0 : i32
      %305 = tpu.memref_slice %arg7[%242, %c0_i32_149] : memref<64x2xf32, #tpu.memory_space<any>> -> memref<1x2xf32, #tpu.memory_space<any>>
      %306 = tpu.memref_slice %arg9[%239] : memref<8x!tpu.dma_semaphore, #tpu.memory_space<semaphore_mem>> -> memref<1x!tpu.dma_semaphore, #tpu.memory_space<semaphore_mem>>
      %307 = tpu.memref_squeeze %306 : memref<1x!tpu.dma_semaphore, #tpu.memory_space<semaphore_mem>> -> memref<!tpu.dma_semaphore, #tpu.memory_space<semaphore_mem>>
      tpu.enqueue_dma source(%304 : memref<1x2xf32, #tpu.memory_space<vmem>>) target(%305 : memref<1x2xf32, #tpu.memory_space<any>>) target_semaphore(%307 : memref<!tpu.dma_semaphore, #tpu.memory_space<semaphore_mem>>)
    } else {
    }
    %c8_i32_123 = arith.constant 8 : i32
    %c0_i32_124 = arith.constant 0 : i32
    %256 = arith.addi %0, %c0_i32_124 : i32
    %257 = arith.index_cast %256 : i32 to index
    %258 = memref.load %arg4[%257] : memref<8xi32, #tpu.memory_space<smem>>
    %c0_i32_125 = arith.constant 0 : i32
    %259 = arith.cmpi sge, %258, %c0_i32_125 : i32
    %260 = arith.extui %259 : i1 to i32
    %c0_i32_126 = arith.constant 0 : i32
    %261 = arith.cmpi ne, %260, %c0_i32_126 : i32
    scf.if %261 {
      %c0_i32_148 = arith.constant 0 : i32
      %c0_i32_149 = arith.constant 0 : i32
      %c0_i32_150 = arith.constant 0 : i32
      %304 = tpu.memref_slice %arg8[%c0_i32_149, %c0_i32_150] : memref<8x2xf32, #tpu.memory_space<vmem>> -> memref<1x2xf32, #tpu.memory_space<vmem>>
      %c0_i32_151 = arith.constant 0 : i32
      %c0_i32_152 = arith.constant 0 : i32
      %305 = tpu.memref_slice %arg7[%c0_i32_151, %c0_i32_152] : memref<64x2xf32, #tpu.memory_space<any>> -> memref<1x2xf32, #tpu.memory_space<any>>
      %306 = tpu.memref_slice %arg9[%c0_i32_148] : memref<8x!tpu.dma_semaphore, #tpu.memory_space<semaphore_mem>> -> memref<1x!tpu.dma_semaphore, #tpu.memory_space<semaphore_mem>>
      %307 = tpu.memref_squeeze %306 : memref<1x!tpu.dma_semaphore, #tpu.memory_space<semaphore_mem>> -> memref<!tpu.dma_semaphore, #tpu.memory_space<semaphore_mem>>
      tpu.wait_dma2 semaphore(%307 : memref<!tpu.dma_semaphore, #tpu.memory_space<semaphore_mem>>) src(%304 : memref<1x2xf32, #tpu.memory_space<vmem>>) dst(%305 : memref<1x2xf32, #tpu.memory_space<any>>)
    } else {
    }
    %c1_i32_127 = arith.constant 1 : i32
    %262 = arith.addi %0, %c1_i32_127 : i32
    %263 = arith.index_cast %262 : i32 to index
    %264 = memref.load %arg4[%263] : memref<8xi32, #tpu.memory_space<smem>>
    %c0_i32_128 = arith.constant 0 : i32
    %265 = arith.cmpi sge, %264, %c0_i32_128 : i32
    %266 = arith.extui %265 : i1 to i32
    %c0_i32_129 = arith.constant 0 : i32
    %267 = arith.cmpi ne, %266, %c0_i32_129 : i32
    scf.if %267 {
      %c1_i32_148 = arith.constant 1 : i32
      %c0_i32_149 = arith.constant 0 : i32
      %c0_i32_150 = arith.constant 0 : i32
      %304 = tpu.memref_slice %arg8[%c0_i32_149, %c0_i32_150] : memref<8x2xf32, #tpu.memory_space<vmem>> -> memref<1x2xf32, #tpu.memory_space<vmem>>
      %c0_i32_151 = arith.constant 0 : i32
      %c0_i32_152 = arith.constant 0 : i32
      %305 = tpu.memref_slice %arg7[%c0_i32_151, %c0_i32_152] : memref<64x2xf32, #tpu.memory_space<any>> -> memref<1x2xf32, #tpu.memory_space<any>>
      %306 = tpu.memref_slice %arg9[%c1_i32_148] : memref<8x!tpu.dma_semaphore, #tpu.memory_space<semaphore_mem>> -> memref<1x!tpu.dma_semaphore, #tpu.memory_space<semaphore_mem>>
      %307 = tpu.memref_squeeze %306 : memref<1x!tpu.dma_semaphore, #tpu.memory_space<semaphore_mem>> -> memref<!tpu.dma_semaphore, #tpu.memory_space<semaphore_mem>>
      tpu.wait_dma2 semaphore(%307 : memref<!tpu.dma_semaphore, #tpu.memory_space<semaphore_mem>>) src(%304 : memref<1x2xf32, #tpu.memory_space<vmem>>) dst(%305 : memref<1x2xf32, #tpu.memory_space<any>>)
    } else {
    }
    %c2_i32_130 = arith.constant 2 : i32
    %268 = arith.addi %0, %c2_i32_130 : i32
    %269 = arith.index_cast %268 : i32 to index
    %270 = memref.load %arg4[%269] : memref<8xi32, #tpu.memory_space<smem>>
    %c0_i32_131 = arith.constant 0 : i32
    %271 = arith.cmpi sge, %270, %c0_i32_131 : i32
    %272 = arith.extui %271 : i1 to i32
    %c0_i32_132 = arith.constant 0 : i32
    %273 = arith.cmpi ne, %272, %c0_i32_132 : i32
    scf.if %273 {
      %c2_i32_148 = arith.constant 2 : i32
      %c0_i32_149 = arith.constant 0 : i32
      %c0_i32_150 = arith.constant 0 : i32
      %304 = tpu.memref_slice %arg8[%c0_i32_149, %c0_i32_150] : memref<8x2xf32, #tpu.memory_space<vmem>> -> memref<1x2xf32, #tpu.memory_space<vmem>>
      %c0_i32_151 = arith.constant 0 : i32
      %c0_i32_152 = arith.constant 0 : i32
      %305 = tpu.memref_slice %arg7[%c0_i32_151, %c0_i32_152] : memref<64x2xf32, #tpu.memory_space<any>> -> memref<1x2xf32, #tpu.memory_space<any>>
      %306 = tpu.memref_slice %arg9[%c2_i32_148] : memref<8x!tpu.dma_semaphore, #tpu.memory_space<semaphore_mem>> -> memref<1x!tpu.dma_semaphore, #tpu.memory_space<semaphore_mem>>
      %307 = tpu.memref_squeeze %306 : memref<1x!tpu.dma_semaphore, #tpu.memory_space<semaphore_mem>> -> memref<!tpu.dma_semaphore, #tpu.memory_space<semaphore_mem>>
      tpu.wait_dma2 semaphore(%307 : memref<!tpu.dma_semaphore, #tpu.memory_space<semaphore_mem>>) src(%304 : memref<1x2xf32, #tpu.memory_space<vmem>>) dst(%305 : memref<1x2xf32, #tpu.memory_space<any>>)
    } else {
    }
    %c3_i32_133 = arith.constant 3 : i32
    %274 = arith.addi %0, %c3_i32_133 : i32
    %275 = arith.index_cast %274 : i32 to index
    %276 = memref.load %arg4[%275] : memref<8xi32, #tpu.memory_space<smem>>
    %c0_i32_134 = arith.constant 0 : i32
    %277 = arith.cmpi sge, %276, %c0_i32_134 : i32
    %278 = arith.extui %277 : i1 to i32
    %c0_i32_135 = arith.constant 0 : i32
    %279 = arith.cmpi ne, %278, %c0_i32_135 : i32
    scf.if %279 {
      %c3_i32_148 = arith.constant 3 : i32
      %c0_i32_149 = arith.constant 0 : i32
      %c0_i32_150 = arith.constant 0 : i32
      %304 = tpu.memref_slice %arg8[%c0_i32_149, %c0_i32_150] : memref<8x2xf32, #tpu.memory_space<vmem>> -> memref<1x2xf32, #tpu.memory_space<vmem>>
      %c0_i32_151 = arith.constant 0 : i32
      %c0_i32_152 = arith.constant 0 : i32
      %305 = tpu.memref_slice %arg7[%c0_i32_151, %c0_i32_152] : memref<64x2xf32, #tpu.memory_space<any>> -> memref<1x2xf32, #tpu.memory_space<any>>
      %306 = tpu.memref_slice %arg9[%c3_i32_148] : memref<8x!tpu.dma_semaphore, #tpu.memory_space<semaphore_mem>> -> memref<1x!tpu.dma_semaphore, #tpu.memory_space<semaphore_mem>>
      %307 = tpu.memref_squeeze %306 : memref<1x!tpu.dma_semaphore, #tpu.memory_space<semaphore_mem>> -> memref<!tpu.dma_semaphore, #tpu.memory_space<semaphore_mem>>
      tpu.wait_dma2 semaphore(%307 : memref<!tpu.dma_semaphore, #tpu.memory_space<semaphore_mem>>) src(%304 : memref<1x2xf32, #tpu.memory_space<vmem>>) dst(%305 : memref<1x2xf32, #tpu.memory_space<any>>)
    } else {
    }
    %c4_i32_136 = arith.constant 4 : i32
    %280 = arith.addi %0, %c4_i32_136 : i32
    %281 = arith.index_cast %280 : i32 to index
    %282 = memref.load %arg4[%281] : memref<8xi32, #tpu.memory_space<smem>>
    %c0_i32_137 = arith.constant 0 : i32
    %283 = arith.cmpi sge, %282, %c0_i32_137 : i32
    %284 = arith.extui %283 : i1 to i32
    %c0_i32_138 = arith.constant 0 : i32
    %285 = arith.cmpi ne, %284, %c0_i32_138 : i32
    scf.if %285 {
      %c4_i32_148 = arith.constant 4 : i32
      %c0_i32_149 = arith.constant 0 : i32
      %c0_i32_150 = arith.constant 0 : i32
      %304 = tpu.memref_slice %arg8[%c0_i32_149, %c0_i32_150] : memref<8x2xf32, #tpu.memory_space<vmem>> -> memref<1x2xf32, #tpu.memory_space<vmem>>
      %c0_i32_151 = arith.constant 0 : i32
      %c0_i32_152 = arith.constant 0 : i32
      %305 = tpu.memref_slice %arg7[%c0_i32_151, %c0_i32_152] : memref<64x2xf32, #tpu.memory_space<any>> -> memref<1x2xf32, #tpu.memory_space<any>>
      %306 = tpu.memref_slice %arg9[%c4_i32_148] : memref<8x!tpu.dma_semaphore, #tpu.memory_space<semaphore_mem>> -> memref<1x!tpu.dma_semaphore, #tpu.memory_space<semaphore_mem>>
      %307 = tpu.memref_squeeze %306 : memref<1x!tpu.dma_semaphore, #tpu.memory_space<semaphore_mem>> -> memref<!tpu.dma_semaphore, #tpu.memory_space<semaphore_mem>>
      tpu.wait_dma2 semaphore(%307 : memref<!tpu.dma_semaphore, #tpu.memory_space<semaphore_mem>>) src(%304 : memref<1x2xf32, #tpu.memory_space<vmem>>) dst(%305 : memref<1x2xf32, #tpu.memory_space<any>>)
    } else {
    }
    %c5_i32_139 = arith.constant 5 : i32
    %286 = arith.addi %0, %c5_i32_139 : i32
    %287 = arith.index_cast %286 : i32 to index
    %288 = memref.load %arg4[%287] : memref<8xi32, #tpu.memory_space<smem>>
    %c0_i32_140 = arith.constant 0 : i32
    %289 = arith.cmpi sge, %288, %c0_i32_140 : i32
    %290 = arith.extui %289 : i1 to i32
    %c0_i32_141 = arith.constant 0 : i32
    %291 = arith.cmpi ne, %290, %c0_i32_141 : i32
    scf.if %291 {
      %c5_i32_148 = arith.constant 5 : i32
      %c0_i32_149 = arith.constant 0 : i32
      %c0_i32_150 = arith.constant 0 : i32
      %304 = tpu.memref_slice %arg8[%c0_i32_149, %c0_i32_150] : memref<8x2xf32, #tpu.memory_space<vmem>> -> memref<1x2xf32, #tpu.memory_space<vmem>>
      %c0_i32_151 = arith.constant 0 : i32
      %c0_i32_152 = arith.constant 0 : i32
      %305 = tpu.memref_slice %arg7[%c0_i32_151, %c0_i32_152] : memref<64x2xf32, #tpu.memory_space<any>> -> memref<1x2xf32, #tpu.memory_space<any>>
      %306 = tpu.memref_slice %arg9[%c5_i32_148] : memref<8x!tpu.dma_semaphore, #tpu.memory_space<semaphore_mem>> -> memref<1x!tpu.dma_semaphore, #tpu.memory_space<semaphore_mem>>
      %307 = tpu.memref_squeeze %306 : memref<1x!tpu.dma_semaphore, #tpu.memory_space<semaphore_mem>> -> memref<!tpu.dma_semaphore, #tpu.memory_space<semaphore_mem>>
      tpu.wait_dma2 semaphore(%307 : memref<!tpu.dma_semaphore, #tpu.memory_space<semaphore_mem>>) src(%304 : memref<1x2xf32, #tpu.memory_space<vmem>>) dst(%305 : memref<1x2xf32, #tpu.memory_space<any>>)
    } else {
    }
    %c6_i32_142 = arith.constant 6 : i32
    %292 = arith.addi %0, %c6_i32_142 : i32
    %293 = arith.index_cast %292 : i32 to index
    %294 = memref.load %arg4[%293] : memref<8xi32, #tpu.memory_space<smem>>
    %c0_i32_143 = arith.constant 0 : i32
    %295 = arith.cmpi sge, %294, %c0_i32_143 : i32
    %296 = arith.extui %295 : i1 to i32
    %c0_i32_144 = arith.constant 0 : i32
    %297 = arith.cmpi ne, %296, %c0_i32_144 : i32
    scf.if %297 {
      %c6_i32_148 = arith.constant 6 : i32
      %c0_i32_149 = arith.constant 0 : i32
      %c0_i32_150 = arith.constant 0 : i32
      %304 = tpu.memref_slice %arg8[%c0_i32_149, %c0_i32_150] : memref<8x2xf32, #tpu.memory_space<vmem>> -> memref<1x2xf32, #tpu.memory_space<vmem>>
      %c0_i32_151 = arith.constant 0 : i32
      %c0_i32_152 = arith.constant 0 : i32
      %305 = tpu.memref_slice %arg7[%c0_i32_151, %c0_i32_152] : memref<64x2xf32, #tpu.memory_space<any>> -> memref<1x2xf32, #tpu.memory_space<any>>
      %306 = tpu.memref_slice %arg9[%c6_i32_148] : memref<8x!tpu.dma_semaphore, #tpu.memory_space<semaphore_mem>> -> memref<1x!tpu.dma_semaphore, #tpu.memory_space<semaphore_mem>>
      %307 = tpu.memref_squeeze %306 : memref<1x!tpu.dma_semaphore, #tpu.memory_space<semaphore_mem>> -> memref<!tpu.dma_semaphore, #tpu.memory_space<semaphore_mem>>
      tpu.wait_dma2 semaphore(%307 : memref<!tpu.dma_semaphore, #tpu.memory_space<semaphore_mem>>) src(%304 : memref<1x2xf32, #tpu.memory_space<vmem>>) dst(%305 : memref<1x2xf32, #tpu.memory_space<any>>)
    } else {
    }
    %c7_i32_145 = arith.constant 7 : i32
    %298 = arith.addi %0, %c7_i32_145 : i32
    %299 = arith.index_cast %298 : i32 to index
    %300 = memref.load %arg4[%299] : memref<8xi32, #tpu.memory_space<smem>>
    %c0_i32_146 = arith.constant 0 : i32
    %301 = arith.cmpi sge, %300, %c0_i32_146 : i32
    %302 = arith.extui %301 : i1 to i32
    %c0_i32_147 = arith.constant 0 : i32
    %303 = arith.cmpi ne, %302, %c0_i32_147 : i32
    scf.if %303 {
      %c7_i32_148 = arith.constant 7 : i32
      %c0_i32_149 = arith.constant 0 : i32
      %c0_i32_150 = arith.constant 0 : i32
      %304 = tpu.memref_slice %arg8[%c0_i32_149, %c0_i32_150] : memref<8x2xf32, #tpu.memory_space<vmem>> -> memref<1x2xf32, #tpu.memory_space<vmem>>
      %c0_i32_151 = arith.constant 0 : i32
      %c0_i32_152 = arith.constant 0 : i32
      %305 = tpu.memref_slice %arg7[%c0_i32_151, %c0_i32_152] : memref<64x2xf32, #tpu.memory_space<any>> -> memref<1x2xf32, #tpu.memory_space<any>>
      %306 = tpu.memref_slice %arg9[%c7_i32_148] : memref<8x!tpu.dma_semaphore, #tpu.memory_space<semaphore_mem>> -> memref<1x!tpu.dma_semaphore, #tpu.memory_space<semaphore_mem>>
      %307 = tpu.memref_squeeze %306 : memref<1x!tpu.dma_semaphore, #tpu.memory_space<semaphore_mem>> -> memref<!tpu.dma_semaphore, #tpu.memory_space<semaphore_mem>>
      tpu.wait_dma2 semaphore(%307 : memref<!tpu.dma_semaphore, #tpu.memory_space<semaphore_mem>>) src(%304 : memref<1x2xf32, #tpu.memory_space<vmem>>) dst(%305 : memref<1x2xf32, #tpu.memory_space<any>>)
    } else {
    }
    return
  }
  func.func @transform_0(%arg0: i32) -> (i32, i32) {
    %c0_i32 = arith.constant 0 : i32
    %c0_i32_0 = arith.constant 0 : i32
    %c0_i32_1 = arith.constant 0 : i32
    return %c0_i32, %c0_i32_0 : i32, i32
  }
  func.func @transform_1(%arg0: i32) -> (i32, i32) {
    %c0_i32 = arith.constant 0 : i32
    %c0_i32_0 = arith.constant 0 : i32
    %c0_i32_1 = arith.constant 0 : i32
    return %c0_i32, %c0_i32_0 : i32, i32
  }
  func.func @transform_2(%arg0: i32) -> (i32, i32) {
    %c0_i32 = arith.constant 0 : i32
    %c0_i32_0 = arith.constant 0 : i32
    return %arg0, %c0_i32 : i32, i32
  }
  func.func @transform_3(%arg0: i32) -> i32 {
    %c0_i32 = arith.constant 0 : i32
    %c0_i32_0 = arith.constant 0 : i32
    return %c0_i32 : i32
  }
  func.func @transform_5(%arg0: i32) -> (i32, i32) {
    %c0_i32 = arith.constant 0 : i32
    %c0_i32_0 = arith.constant 0 : i32
    return %arg0, %c0_i32 : i32, i32
  }
}

</mosaic_0001>

<llo_original>
// kernel: adap_mm_forward.1
$region0: #{adap_mm_forward.1}
  #allocation0 [shape = 'u32[]', space=smem, size = 0x4, offset = 0x4, fixed_abs, tag = 'smem constant byte address 0x4 - core index']
  #allocation1 [shape = 'u32[72,128]{1,0:T(1,128)}', space=vmem, size = 0x9000, scoped, tag = 'internal scratch']
  #allocation2 [shape = 'f32[8,2]{1,0:T(8,128)}', space=vmem, size = 0x1000, scoped, tag = 'scratch operand']
  #allocation3 [shape = 's32[8]{0}', space=sflag, size = 0x20, scoped, tag = 'scratch operand']
  #allocation6 [shape = 's32[]', space=sflag, size = 0x4, offset = 0, fixed_abs, tag = 'sflag constant byte address 0x0 - dummy sync flag']
  #allocation7 [shape = 's32[]', space=sflag, size = 0x4, offset = 0, fixed_abs, tag = 'sflag constant byte address 0x0 - dummy sync flag']
  #allocation8 [shape = 's32[]', space=sflag, size = 0x4, offset = 0, fixed_abs, tag = 'sflag constant byte address 0x0 - dummy sync flag']
  #allocation9 [shape = 's32[]', space=sflag, size = 0x4, offset = 0, fixed_abs, tag = 'sflag constant byte address 0x0 - dummy sync flag']
  #allocation10 [shape = 's32[]', space=sflag, size = 0x4, offset = 0, fixed_abs, tag = 'sflag constant byte address 0x0 - dummy sync flag']
  #allocation11 [shape = 's32[]', space=sflag, size = 0x4, offset = 0, fixed_abs, tag = 'sflag constant byte address 0x0 - dummy sync flag']
  #allocation12 [shape = 's32[]', space=sflag, size = 0x4, offset = 0, fixed_abs, tag = 'sflag constant byte address 0x0 - dummy sync flag']
  #allocation13 [shape = 's32[]', space=sflag, size = 0x4, offset = 0, fixed_abs, tag = 'sflag constant byte address 0x0 - dummy sync flag']
  %s0 = inlined_call_operand.vmem [shape: f32[1,8], index: 0, kind: input, shape index: {}]
  %s1 = inlined_call_operand.vmem [shape: f32[1,8], index: 1, kind: input, shape index: {}]
  %s2 = inlined_call_operand.vmem [shape: f32[8,4], index: 2, kind: input, shape index: {}]
  %s3 = inlined_call_operand.vmem [shape: s32[8], index: 3, kind: input, shape index: {}]
  %s4 = inlined_call_operand.vmem [shape: f32[64,2], index: 4, kind: input, shape index: {}, may-alias: {4,6}]
  %s5 = inlined_call_operand.vmem [shape: f32[8,1], index: 5, kind: output, shape index: {0}]
  %s6 = inlined_call_operand.vmem [shape: f32[64,2], index: 6, kind: output, shape index: {1}, may-alias: {4,6}]
  %7 = xla_tuple %s5, %s6
  %s8 = sld [smem:[#allocation0]]
  $region334: #{adap_mm_forward.1} parent=0
    _
  %s10 = ssub.s32 1, %s8
  %s11 = scalar_select 0, %s10, %s8
  $region1: #{adap_mm_forward.1} parent=0
    #allocation4 [shape = 'u8[512]{0}', space=smem, size = 0x200, scoped, tag = 'input window, operand 3, single buffered']
    #allocation5 [shape = 's32[1]{0}', space=sflag, size = 0x4, scoped, tag = 'scoped memory for adap_mm_forward.1']
    %12 = vsyncpa [#allocation5], 0
    // Predicated region
    $region2: #{adap_mm_forward.1} parent=1 // pred_check
      _
    $region3: #{adap_mm_forward.1} parent=1 // pred_check_branch
      %14 = sbr.rel (0) target = $region5
    $region4: #{adap_mm_forward.1} parent=1 // pred_region
      _
    $region5: #{adap_mm_forward.1} parent=1 // pred_fallthru
      _
    // Predicated region
    $region6: #{adap_mm_forward.1} parent=1 // pred_check
      _
    $region7: #{adap_mm_forward.1} parent=1 // pred_check_branch
      %16 = sbr.rel (0) target = $region9
    $region8: #{adap_mm_forward.1} parent=1 // pred_region
      _
    $region9: #{adap_mm_forward.1} parent=1 // pred_fallthru
      _
    // Predicated region
    $region10: #{adap_mm_forward.1} parent=1 // pred_check
      _
    $region11: #{adap_mm_forward.1} parent=1 // pred_check_branch
      %18 = sbr.rel (0) target = $region13
    $region12: #{adap_mm_forward.1} parent=1 // pred_region
      _
    $region13: #{adap_mm_forward.1} parent=1 // pred_fallthru
      _
    // Predicated region
    $region14: #{adap_mm_forward.1} parent=1 // pred_check
      _
    $region15: #{adap_mm_forward.1} parent=1 // pred_check_branch
      %20 = sbr.rel (0) target = $region17
    $region16: #{adap_mm_forward.1} parent=1 // pred_region
      %22 = vsyncadd [#allocation5], 0
      %s24 = sshll.u32 %s3, 4
      %s25 = int_to_ptr.vmem [resolvable:$true] %s24
      %27 = dma.vmem_to_smem %s25, 16, [#allocation4], [#allocation5]
    $region17: #{adap_mm_forward.1} parent=1 // pred_fallthru
      _
    // Predicated region
    $region18: #{adap_mm_forward.1} parent=1 // pred_check
      _
    $region19: #{adap_mm_forward.1} parent=1 // pred_check_branch
      %29 = sbr.rel (0) target = $region21
    $region20: #{adap_mm_forward.1} parent=1 // pred_region
      %31 = dma.done [#allocation5], 16
    $region21: #{adap_mm_forward.1} parent=1 // pred_fallthru
      _
    %32 = sfence
    %s33 = smul.u32 0, 8
    %v34 = vld [vmem:[%s0] sm:$0x1]
    %v35 = vld [vmem:[%s1] sm:$0x1]
    %v36 = vld [vmem:[%s2] sm:$0xff]
    %v37 = vadd.f32 %v34, 1.0
    %v39 = vperm.slane %v37, 0
    %42 = vset.pattern.permute.xlu0 0
    %43 = vperm.xlu0 %42, %v36
    %v44 = vpop.permute.xlu0 %43
    %v46 = vsub.f32 %v39, %v44
    %v47 = vmax.f32 %v46, 0.0
    %v48 = vmul.f32 %v47, %v47
    %vm49 = vcmask 64512
    %v50 = vsel %vm49, %v48, 0.0
    %51 = vadd.xlane.f32.xlu0 %v50
    %v52 = vpop.xlane.xlu0 %51
    %v54 = vperm.slane %v35, 0
    %v56 = vmul.f32 %v48, %v54
    %v57 = vsel %vm49, %v56, 0.0
    %58 = vadd.xlane.f32.xlu0 %v57
    %v59 = vpop.xlane.xlu0 %58
    %v60 = vmul.f32 %v36, 0.1
    %v61 = vmul.f32 %v52, 0.125
    %v62 = vmul.f32 %v61, 0.9
    %v63 = vadd.f32 %v60, %v62
    %v64 = vmul.f32 %v59, 0.125
    %v65 = vmul.f32 %v64, 0.9
    %v66 = vadd.f32 %v60, %v65
    %v67 = vmul.f32 %v63, %v63
    %v68 = vsub.f32 1.0, %v36
    %70 = vrot.lane.b32.xlu0 %v68, 1
    %v71 = vpop.permute.xlu0 %70
    %v73 = vadd.f32 %v67, %v71
    %75 = vrot.lane.b32.xlu0 %v73, 127
    %v76 = vpop.permute.xlu0 %75
    %v78 = vrcp.pop %v76
    %v79 = vmul.f32 %v76, %v78
    %v80 = vsub.f32 1.0, %v79
    %v81 = vmul.f32 %v78, %v80
    %v82 = vadd.f32 %v78, %v81
    %vm83 = vweird.f32 %v76
    %vm84 = vweird.f32 %v78
    %vm85 = vmor %vm83, %vm84
    %v86 = vsel %vm85, %v78, %v82
    %v87 = vand.u32 2147483647, %v76
    %vm88 = vcmp.eq.f32.partialorder %v87, 8.507059e+37
    %v89 = vand.u32 %v76, 2147483648
    %v90 = vor.u32 1.1754944e-38, %v89
    %v91 = vsel %vm88, %v90, %v86
    %v92 = vmul.f32 %v36, %v91
    %v93 = vmul.f32 %v66, %v52
    %v94 = vmul.f32 %v63, %v59
    %96 = vrot.lane.b32.xlu0 %v94, 1
    %v97 = vpop.permute.xlu0 %96
    %v99 = vsub.f32 %v93, %v97
    %101 = vrot.lane.b32.xlu0 %v99, 126
    %v102 = vpop.permute.xlu0 %101
    %v104 = vmul.f32 %v92, %v102
    %106 = vrot.lane.b32.xlu0 %v104, 127
    %v107 = vpop.permute.xlu0 %106
    %vm109 = vcmask 7168
    %110 = vst.msk [vmem:[%s5] sm:$0xff] %vm109, %v107
    %112 = vrot.lane.b32.xlu0 %v63, 126
    %v113 = vpop.permute.xlu0 %112
    %116 = vrot.lane.b32.xlu0 %v66, 126
    %v117 = vpop.permute.xlu0 %116
    %v119 = vsel %vm109, %v113, %v117
    %vm120 = vcmask 15360
    %121 = vst.msk [vmem:[#allocation2] sm:$0xff] %vm120, %v119
    %s122 = sld [smem:[#allocation4 + %s33]]
    %p123 = scmp.ge.s32.totalorder %s122, 0
    // Predicated region
    $region22: #{adap_mm_forward.1} parent=1 // pred_check
      %p124 = pneg %p123
    $region23: #{adap_mm_forward.1} parent=1 // pred_check_branch
      %126 = sbr.rel (%p124) target = $region25
    $region24: #{adap_mm_forward.1} parent=1 // pred_region
      %s127 = scalar_lea.vmem %s6, %s122
      // Predicated region
      $region26: #{adap_mm_forward.1} parent=24 // pred_check
        _
      $region27: #{adap_mm_forward.1} parent=24 // pred_check_branch
        %129 = sbr.rel target = $region29
      $region28: #{adap_mm_forward.1} parent=24 // pred_region
        // Predicated region
        $region41: #{adap_mm_forward.1} parent=28 // pred_check
          _
        $region42: #{adap_mm_forward.1} parent=28 // pred_check_branch
          %145 = sbr.rel (0) target = $region44
        $region43: #{adap_mm_forward.1} parent=28 // pred_region
          %s147 = ssub.s32 2, 1
          loop: start=0, step=1, limit=1
          $region45: #{adap_mm_forward.1} parent=43 // loop_pre_header
            _
          $region46: #{adap_mm_forward.1} parent=43 // loop_header
            %s149 = sphi 0, %s153
            %p150 = scmp.ge.s32.totalorder %s149, 1
            %s154 = sphi [#allocation2], [#allocation2]
            %s155 = sphi %s127, %s127
          $region47: #{adap_mm_forward.1} parent=43 // loop_header_branch
            %152 = sbr.rel (%p150) target = $region51
          $region48: #{adap_mm_forward.1} parent=43 // loop_body
            %v156 = vld [vmem:[%s154] sm:%s147]
            %157 = vst [vmem:[%s155] sm:%s147] %v156
          $region49: #{adap_mm_forward.1} parent=43 // loop_footer
            %s153 = sadd.s32 1, %s149
          $region50: #{adap_mm_forward.1} parent=43 // loop_footer_branch
            %148 = sbr.rel target = $region46
          $region51: #{adap_mm_forward.1} parent=43 // loop_exit
            _
        $region44: #{adap_mm_forward.1} parent=28 // pred_fallthru
          _
      $region29: #{adap_mm_forward.1} parent=24 // pred_fallthru
        _
      // Predicated region
      $region30: #{adap_mm_forward.1} parent=24 // pred_check
        _
      $region31: #{adap_mm_forward.1} parent=24 // pred_check_branch
        %131 = sbr.rel (0) target = $region33
      $region32: #{adap_mm_forward.1} parent=24 // pred_region
        %s133 = ssub.s32 2, 1
        loop: start=0, step=1, limit=1
        $region34: #{adap_mm_forward.1} parent=32 // loop_pre_header
          _
        $region35: #{adap_mm_forward.1} parent=32 // loop_header
          %s135 = sphi 0, %s139
          %p136 = scmp.ge.s32.totalorder %s135, 1
          %s140 = sphi [#allocation2], [#allocation2]
          %s141 = sphi %s127, %s127
        $region36: #{adap_mm_forward.1} parent=32 // loop_header_branch
          %138 = sbr.rel (%p136) target = $region40
        $region37: #{adap_mm_forward.1} parent=32 // loop_body
          %v142 = vld [vmem:[%s140] sm:%s133]
          %143 = vst [vmem:[%s141] sm:%s133] %v142
        $region38: #{adap_mm_forward.1} parent=32 // loop_footer
          %s139 = sadd.s32 1, %s135
        $region39: #{adap_mm_forward.1} parent=32 // loop_footer_branch
          %134 = sbr.rel target = $region35
        $region40: #{adap_mm_forward.1} parent=32 // loop_exit
          _
      $region33: #{adap_mm_forward.1} parent=24 // pred_fallthru
        _
      // Predicated region
      $region52: #{adap_mm_forward.1} parent=24 // pred_check
        _
      $region53: #{adap_mm_forward.1} parent=24 // pred_check_branch
        %160 = sbr.rel (0) target = $region55
      $region54: #{adap_mm_forward.1} parent=24 // pred_region
        %161 = vsyncadd [#allocation3], 16
      $region55: #{adap_mm_forward.1} parent=24 // pred_fallthru
        _
    $region25: #{adap_mm_forward.1} parent=1 // pred_fallthru
      _
    %s162 = sadd.s32 %s33, 1
    %s163 = sld [smem:[#allocation4 + %s162]]
    %p164 = scmp.ge.s32.totalorder %s163, 0
    // Predicated region
    $region56: #{adap_mm_forward.1} parent=1 // pred_check
      %p165 = pneg %p164
    $region57: #{adap_mm_forward.1} parent=1 // pred_check_branch
      %167 = sbr.rel (%p165) target = $region59
    $region58: #{adap_mm_forward.1} parent=1 // pred_region
      %s168 = scalar_lea.vmem [#allocation2], 1
      %s169 = scalar_lea.vmem %s6, %s163
      %s170 = scalar_lea.sflag [#allocation3], 1
      // Predicated region
      $region60: #{adap_mm_forward.1} parent=58 // pred_check
        _
      $region61: #{adap_mm_forward.1} parent=58 // pred_check_branch
        %172 = sbr.rel target = $region63
      $region62: #{adap_mm_forward.1} parent=58 // pred_region
        // Predicated region
        $region75: #{adap_mm_forward.1} parent=62 // pred_check
          _
        $region76: #{adap_mm_forward.1} parent=62 // pred_check_branch
          %188 = sbr.rel (0) target = $region78
        $region77: #{adap_mm_forward.1} parent=62 // pred_region
          %s190 = ssub.s32 2, 1
          loop: start=0, step=1, limit=1
          $region79: #{adap_mm_forward.1} parent=77 // loop_pre_header
            _
          $region80: #{adap_mm_forward.1} parent=77 // loop_header
            %s192 = sphi 0, %s196
            %p193 = scmp.ge.s32.totalorder %s192, 1
            %s197 = sphi %s168, %s168
            %s198 = sphi %s169, %s169
          $region81: #{adap_mm_forward.1} parent=77 // loop_header_branch
            %195 = sbr.rel (%p193) target = $region85
          $region82: #{adap_mm_forward.1} parent=77 // loop_body
            %v199 = vld [vmem:[%s197] sm:%s190]
            %200 = vst [vmem:[%s198] sm:%s190] %v199
          $region83: #{adap_mm_forward.1} parent=77 // loop_footer
            %s196 = sadd.s32 1, %s192
          $region84: #{adap_mm_forward.1} parent=77 // loop_footer_branch
            %191 = sbr.rel target = $region80
          $region85: #{adap_mm_forward.1} parent=77 // loop_exit
            _
        $region78: #{adap_mm_forward.1} parent=62 // pred_fallthru
          _
      $region63: #{adap_mm_forward.1} parent=58 // pred_fallthru
        _
      // Predicated region
      $region64: #{adap_mm_forward.1} parent=58 // pred_check
        _
      $region65: #{adap_mm_forward.1} parent=58 // pred_check_branch
        %174 = sbr.rel (0) target = $region67
      $region66: #{adap_mm_forward.1} parent=58 // pred_region
        %s176 = ssub.s32 2, 1
        loop: start=0, step=1, limit=1
        $region68: #{adap_mm_forward.1} parent=66 // loop_pre_header
          _
        $region69: #{adap_mm_forward.1} parent=66 // loop_header
          %s178 = sphi 0, %s182
          %p179 = scmp.ge.s32.totalorder %s178, 1
          %s183 = sphi %s168, %s168
          %s184 = sphi %s169, %s169
        $region70: #{adap_mm_forward.1} parent=66 // loop_header_branch
          %181 = sbr.rel (%p179) target = $region74
        $region71: #{adap_mm_forward.1} parent=66 // loop_body
          %v185 = vld [vmem:[%s183] sm:%s176]
          %186 = vst [vmem:[%s184] sm:%s176] %v185
        $region72: #{adap_mm_forward.1} parent=66 // loop_footer
          %s182 = sadd.s32 1, %s178
        $region73: #{adap_mm_forward.1} parent=66 // loop_footer_branch
          %177 = sbr.rel target = $region69
        $region74: #{adap_mm_forward.1} parent=66 // loop_exit
          _
      $region67: #{adap_mm_forward.1} parent=58 // pred_fallthru
        _
      // Predicated region
      $region86: #{adap_mm_forward.1} parent=58 // pred_check
        _
      $region87: #{adap_mm_forward.1} parent=58 // pred_check_branch
        %203 = sbr.rel (0) target = $region89
      $region88: #{adap_mm_forward.1} parent=58 // pred_region
        %204 = vsyncadd %s170, 16
      $region89: #{adap_mm_forward.1} parent=58 // pred_fallthru
        _
    $region59: #{adap_mm_forward.1} parent=1 // pred_fallthru
      _
    %s205 = sadd.s32 %s33, 2
    %s206 = sld [smem:[#allocation4 + %s205]]
    %p207 = scmp.ge.s32.totalorder %s206, 0
    // Predicated region
    $region90: #{adap_mm_forward.1} parent=1 // pred_check
      %p208 = pneg %p207
    $region91: #{adap_mm_forward.1} parent=1 // pred_check_branch
      %210 = sbr.rel (%p208) target = $region93
    $region92: #{adap_mm_forward.1} parent=1 // pred_region
      %s211 = scalar_lea.vmem [#allocation2], 2
      %s212 = scalar_lea.vmem %s6, %s206
      %s213 = scalar_lea.sflag [#allocation3], 2
      // Predicated region
      $region94: #{adap_mm_forward.1} parent=92 // pred_check
        _
      $region95: #{adap_mm_forward.1} parent=92 // pred_check_branch
        %215 = sbr.rel target = $region97
      $region96: #{adap_mm_forward.1} parent=92 // pred_region
        // Predicated region
        $region109: #{adap_mm_forward.1} parent=96 // pred_check
          _
        $region110: #{adap_mm_forward.1} parent=96 // pred_check_branch
          %231 = sbr.rel (0) target = $region112
        $region111: #{adap_mm_forward.1} parent=96 // pred_region
          %s233 = ssub.s32 2, 1
          loop: start=0, step=1, limit=1
          $region113: #{adap_mm_forward.1} parent=111 // loop_pre_header
            _
          $region114: #{adap_mm_forward.1} parent=111 // loop_header
            %s235 = sphi 0, %s239
            %p236 = scmp.ge.s32.totalorder %s235, 1
            %s240 = sphi %s211, %s211
            %s241 = sphi %s212, %s212
          $region115: #{adap_mm_forward.1} parent=111 // loop_header_branch
            %238 = sbr.rel (%p236) target = $region119
          $region116: #{adap_mm_forward.1} parent=111 // loop_body
            %v242 = vld [vmem:[%s240] sm:%s233]
            %243 = vst [vmem:[%s241] sm:%s233] %v242
          $region117: #{adap_mm_forward.1} parent=111 // loop_footer
            %s239 = sadd.s32 1, %s235
          $region118: #{adap_mm_forward.1} parent=111 // loop_footer_branch
            %234 = sbr.rel target = $region114
          $region119: #{adap_mm_forward.1} parent=111 // loop_exit
            _
        $region112: #{adap_mm_forward.1} parent=96 // pred_fallthru
          _
      $region97: #{adap_mm_forward.1} parent=92 // pred_fallthru
        _
      // Predicated region
      $region98: #{adap_mm_forward.1} parent=92 // pred_check
        _
      $region99: #{adap_mm_forward.1} parent=92 // pred_check_branch
        %217 = sbr.rel (0) target = $region101
      $region100: #{adap_mm_forward.1} parent=92 // pred_region
        %s219 = ssub.s32 2, 1
        loop: start=0, step=1, limit=1
        $region102: #{adap_mm_forward.1} parent=100 // loop_pre_header
          _
        $region103: #{adap_mm_forward.1} parent=100 // loop_header
          %s221 = sphi 0, %s225
          %p222 = scmp.ge.s32.totalorder %s221, 1
          %s226 = sphi %s211, %s211
          %s227 = sphi %s212, %s212
        $region104: #{adap_mm_forward.1} parent=100 // loop_header_branch
          %224 = sbr.rel (%p222) target = $region108
        $region105: #{adap_mm_forward.1} parent=100 // loop_body
          %v228 = vld [vmem:[%s226] sm:%s219]
          %229 = vst [vmem:[%s227] sm:%s219] %v228
        $region106: #{adap_mm_forward.1} parent=100 // loop_footer
          %s225 = sadd.s32 1, %s221
        $region107: #{adap_mm_forward.1} parent=100 // loop_footer_branch
          %220 = sbr.rel target = $region103
        $region108: #{adap_mm_forward.1} parent=100 // loop_exit
          _
      $region101: #{adap_mm_forward.1} parent=92 // pred_fallthru
        _
      // Predicated region
      $region120: #{adap_mm_forward.1} parent=92 // pred_check
        _
      $region121: #{adap_mm_forward.1} parent=92 // pred_check_branch
        %246 = sbr.rel (0) target = $region123
      $region122: #{adap_mm_forward.1} parent=92 // pred_region
        %247 = vsyncadd %s213, 16
      $region123: #{adap_mm_forward.1} parent=92 // pred_fallthru
        _
    $region93: #{adap_mm_forward.1} parent=1 // pred_fallthru
      _
    %s248 = sadd.s32 %s33, 3
    %s249 = sld [smem:[#allocation4 + %s248]]
    %p250 = scmp.ge.s32.totalorder %s249, 0
    // Predicated region
    $region124: #{adap_mm_forward.1} parent=1 // pred_check
      %p251 = pneg %p250
    $region125: #{adap_mm_forward.1} parent=1 // pred_check_branch
      %253 = sbr.rel (%p251) target = $region127
    $region126: #{adap_mm_forward.1} parent=1 // pred_region
      %s254 = scalar_lea.vmem [#allocation2], 3
      %s255 = scalar_lea.vmem %s6, %s249
      %s256 = scalar_lea.sflag [#allocation3], 3
      // Predicated region
      $region128: #{adap_mm_forward.1} parent=126 // pred_check
        _
      $region129: #{adap_mm_forward.1} parent=126 // pred_check_branch
        %258 = sbr.rel target = $region131
      $region130: #{adap_mm_forward.1} parent=126 // pred_region
        // Predicated region
        $region143: #{adap_mm_forward.1} parent=130 // pred_check
          _
        $region144: #{adap_mm_forward.1} parent=130 // pred_check_branch
          %274 = sbr.rel (0) target = $region146
        $region145: #{adap_mm_forward.1} parent=130 // pred_region
          %s276 = ssub.s32 2, 1
          loop: start=0, step=1, limit=1
          $region147: #{adap_mm_forward.1} parent=145 // loop_pre_header
            _
          $region148: #{adap_mm_forward.1} parent=145 // loop_header
            %s278 = sphi 0, %s282
            %p279 = scmp.ge.s32.totalorder %s278, 1
            %s283 = sphi %s254, %s254
            %s284 = sphi %s255, %s255
          $region149: #{adap_mm_forward.1} parent=145 // loop_header_branch
            %281 = sbr.rel (%p279) target = $region153
          $region150: #{adap_mm_forward.1} parent=145 // loop_body
            %v285 = vld [vmem:[%s283] sm:%s276]
            %286 = vst [vmem:[%s284] sm:%s276] %v285
          $region151: #{adap_mm_forward.1} parent=145 // loop_footer
            %s282 = sadd.s32 1, %s278
          $region152: #{adap_mm_forward.1} parent=145 // loop_footer_branch
            %277 = sbr.rel target = $region148
          $region153: #{adap_mm_forward.1} parent=145 // loop_exit
            _
        $region146: #{adap_mm_forward.1} parent=130 // pred_fallthru
          _
      $region131: #{adap_mm_forward.1} parent=126 // pred_fallthru
        _
      // Predicated region
      $region132: #{adap_mm_forward.1} parent=126 // pred_check
        _
      $region133: #{adap_mm_forward.1} parent=126 // pred_check_branch
        %260 = sbr.rel (0) target = $region135
      $region134: #{adap_mm_forward.1} parent=126 // pred_region
        %s262 = ssub.s32 2, 1
        loop: start=0, step=1, limit=1
        $region136: #{adap_mm_forward.1} parent=134 // loop_pre_header
          _
        $region137: #{adap_mm_forward.1} parent=134 // loop_header
          %s264 = sphi 0, %s268
          %p265 = scmp.ge.s32.totalorder %s264, 1
          %s269 = sphi %s254, %s254
          %s270 = sphi %s255, %s255
        $region138: #{adap_mm_forward.1} parent=134 // loop_header_branch
          %267 = sbr.rel (%p265) target = $region142
        $region139: #{adap_mm_forward.1} parent=134 // loop_body
          %v271 = vld [vmem:[%s269] sm:%s262]
          %272 = vst [vmem:[%s270] sm:%s262] %v271
        $region140: #{adap_mm_forward.1} parent=134 // loop_footer
          %s268 = sadd.s32 1, %s264
        $region141: #{adap_mm_forward.1} parent=134 // loop_footer_branch
          %263 = sbr.rel target = $region137
        $region142: #{adap_mm_forward.1} parent=134 // loop_exit
          _
      $region135: #{adap_mm_forward.1} parent=126 // pred_fallthru
        _
      // Predicated region
      $region154: #{adap_mm_forward.1} parent=126 // pred_check
        _
      $region155: #{adap_mm_forward.1} parent=126 // pred_check_branch
        %289 = sbr.rel (0) target = $region157
      $region156: #{adap_mm_forward.1} parent=126 // pred_region
        %290 = vsyncadd %s256, 16
      $region157: #{adap_mm_forward.1} parent=126 // pred_fallthru
        _
    $region127: #{adap_mm_forward.1} parent=1 // pred_fallthru
      _
    %s291 = sadd.s32 %s33, 4
    %s292 = sld [smem:[#allocation4 + %s291]]
    %p293 = scmp.ge.s32.totalorder %s292, 0
    // Predicated region
    $region158: #{adap_mm_forward.1} parent=1 // pred_check
      %p294 = pneg %p293
    $region159: #{adap_mm_forward.1} parent=1 // pred_check_branch
      %296 = sbr.rel (%p294) target = $region161
    $region160: #{adap_mm_forward.1} parent=1 // pred_region
      %s297 = scalar_lea.vmem [#allocation2], 4
      %s298 = scalar_lea.vmem %s6, %s292
      %s299 = scalar_lea.sflag [#allocation3], 4
      // Predicated region
      $region162: #{adap_mm_forward.1} parent=160 // pred_check
        _
      $region163: #{adap_mm_forward.1} parent=160 // pred_check_branch
        %301 = sbr.rel target = $region165
      $region164: #{adap_mm_forward.1} parent=160 // pred_region
        // Predicated region
        $region177: #{adap_mm_forward.1} parent=164 // pred_check
          _
        $region178: #{adap_mm_forward.1} parent=164 // pred_check_branch
          %317 = sbr.rel (0) target = $region180
        $region179: #{adap_mm_forward.1} parent=164 // pred_region
          %s319 = ssub.s32 2, 1
          loop: start=0, step=1, limit=1
          $region181: #{adap_mm_forward.1} parent=179 // loop_pre_header
            _
          $region182: #{adap_mm_forward.1} parent=179 // loop_header
            %s321 = sphi 0, %s325
            %p322 = scmp.ge.s32.totalorder %s321, 1
            %s326 = sphi %s297, %s297
            %s327 = sphi %s298, %s298
          $region183: #{adap_mm_forward.1} parent=179 // loop_header_branch
            %324 = sbr.rel (%p322) target = $region187
          $region184: #{adap_mm_forward.1} parent=179 // loop_body
            %v328 = vld [vmem:[%s326] sm:%s319]
            %329 = vst [vmem:[%s327] sm:%s319] %v328
          $region185: #{adap_mm_forward.1} parent=179 // loop_footer
            %s325 = sadd.s32 1, %s321
          $region186: #{adap_mm_forward.1} parent=179 // loop_footer_branch
            %320 = sbr.rel target = $region182
          $region187: #{adap_mm_forward.1} parent=179 // loop_exit
            _
        $region180: #{adap_mm_forward.1} parent=164 // pred_fallthru
          _
      $region165: #{adap_mm_forward.1} parent=160 // pred_fallthru
        _
      // Predicated region
      $region166: #{adap_mm_forward.1} parent=160 // pred_check
        _
      $region167: #{adap_mm_forward.1} parent=160 // pred_check_branch
        %303 = sbr.rel (0) target = $region169
      $region168: #{adap_mm_forward.1} parent=160 // pred_region
        %s305 = ssub.s32 2, 1
        loop: start=0, step=1, limit=1
        $region170: #{adap_mm_forward.1} parent=168 // loop_pre_header
          _
        $region171: #{adap_mm_forward.1} parent=168 // loop_header
          %s307 = sphi 0, %s311
          %p308 = scmp.ge.s32.totalorder %s307, 1
          %s312 = sphi %s297, %s297
          %s313 = sphi %s298, %s298
        $region172: #{adap_mm_forward.1} parent=168 // loop_header_branch
          %310 = sbr.rel (%p308) target = $region176
        $region173: #{adap_mm_forward.1} parent=168 // loop_body
          %v314 = vld [vmem:[%s312] sm:%s305]
          %315 = vst [vmem:[%s313] sm:%s305] %v314
        $region174: #{adap_mm_forward.1} parent=168 // loop_footer
          %s311 = sadd.s32 1, %s307
        $region175: #{adap_mm_forward.1} parent=168 // loop_footer_branch
          %306 = sbr.rel target = $region171
        $region176: #{adap_mm_forward.1} parent=168 // loop_exit
          _
      $region169: #{adap_mm_forward.1} parent=160 // pred_fallthru
        _
      // Predicated region
      $region188: #{adap_mm_forward.1} parent=160 // pred_check
        _
      $region189: #{adap_mm_forward.1} parent=160 // pred_check_branch
        %332 = sbr.rel (0) target = $region191
      $region190: #{adap_mm_forward.1} parent=160 // pred_region
        %333 = vsyncadd %s299, 16
      $region191: #{adap_mm_forward.1} parent=160 // pred_fallthru
        _
    $region161: #{adap_mm_forward.1} parent=1 // pred_fallthru
      _
    %s334 = sadd.s32 %s33, 5
    %s335 = sld [smem:[#allocation4 + %s334]]
    %p336 = scmp.ge.s32.totalorder %s335, 0
    // Predicated region
    $region192: #{adap_mm_forward.1} parent=1 // pred_check
      %p337 = pneg %p336
    $region193: #{adap_mm_forward.1} parent=1 // pred_check_branch
      %339 = sbr.rel (%p337) target = $region195
    $region194: #{adap_mm_forward.1} parent=1 // pred_region
      %s340 = scalar_lea.vmem [#allocation2], 5
      %s341 = scalar_lea.vmem %s6, %s335
      %s342 = scalar_lea.sflag [#allocation3], 5
      // Predicated region
      $region196: #{adap_mm_forward.1} parent=194 // pred_check
        _
      $region197: #{adap_mm_forward.1} parent=194 // pred_check_branch
        %344 = sbr.rel target = $region199
      $region198: #{adap_mm_forward.1} parent=194 // pred_region
        // Predicated region
        $region211: #{adap_mm_forward.1} parent=198 // pred_check
          _
        $region212: #{adap_mm_forward.1} parent=198 // pred_check_branch
          %360 = sbr.rel (0) target = $region214
        $region213: #{adap_mm_forward.1} parent=198 // pred_region
          %s362 = ssub.s32 2, 1
          loop: start=0, step=1, limit=1
          $region215: #{adap_mm_forward.1} parent=213 // loop_pre_header
            _
          $region216: #{adap_mm_forward.1} parent=213 // loop_header
            %s364 = sphi 0, %s368
            %p365 = scmp.ge.s32.totalorder %s364, 1
            %s369 = sphi %s340, %s340
            %s370 = sphi %s341, %s341
          $region217: #{adap_mm_forward.1} parent=213 // loop_header_branch
            %367 = sbr.rel (%p365) target = $region221
          $region218: #{adap_mm_forward.1} parent=213 // loop_body
            %v371 = vld [vmem:[%s369] sm:%s362]
            %372 = vst [vmem:[%s370] sm:%s362] %v371
          $region219: #{adap_mm_forward.1} parent=213 // loop_footer
            %s368 = sadd.s32 1, %s364
          $region220: #{adap_mm_forward.1} parent=213 // loop_footer_branch
            %363 = sbr.rel target = $region216
          $region221: #{adap_mm_forward.1} parent=213 // loop_exit
            _
        $region214: #{adap_mm_forward.1} parent=198 // pred_fallthru
          _
      $region199: #{adap_mm_forward.1} parent=194 // pred_fallthru
        _
      // Predicated region
      $region200: #{adap_mm_forward.1} parent=194 // pred_check
        _
      $region201: #{adap_mm_forward.1} parent=194 // pred_check_branch
        %346 = sbr.rel (0) target = $region203
      $region202: #{adap_mm_forward.1} parent=194 // pred_region
        %s348 = ssub.s32 2, 1
        loop: start=0, step=1, limit=1
        $region204: #{adap_mm_forward.1} parent=202 // loop_pre_header
          _
        $region205: #{adap_mm_forward.1} parent=202 // loop_header
          %s350 = sphi 0, %s354
          %p351 = scmp.ge.s32.totalorder %s350, 1
          %s355 = sphi %s340, %s340
          %s356 = sphi %s341, %s341
        $region206: #{adap_mm_forward.1} parent=202 // loop_header_branch
          %353 = sbr.rel (%p351) target = $region210
        $region207: #{adap_mm_forward.1} parent=202 // loop_body
          %v357 = vld [vmem:[%s355] sm:%s348]
          %358 = vst [vmem:[%s356] sm:%s348] %v357
        $region208: #{adap_mm_forward.1} parent=202 // loop_footer
          %s354 = sadd.s32 1, %s350
        $region209: #{adap_mm_forward.1} parent=202 // loop_footer_branch
          %349 = sbr.rel target = $region205
        $region210: #{adap_mm_forward.1} parent=202 // loop_exit
          _
      $region203: #{adap_mm_forward.1} parent=194 // pred_fallthru
        _
      // Predicated region
      $region222: #{adap_mm_forward.1} parent=194 // pred_check
        _
      $region223: #{adap_mm_forward.1} parent=194 // pred_check_branch
        %375 = sbr.rel (0) target = $region225
      $region224: #{adap_mm_forward.1} parent=194 // pred_region
        %376 = vsyncadd %s342, 16
      $region225: #{adap_mm_forward.1} parent=194 // pred_fallthru
        _
    $region195: #{adap_mm_forward.1} parent=1 // pred_fallthru
      _
    %s377 = sadd.s32 %s33, 6
    %s378 = sld [smem:[#allocation4 + %s377]]
    %p379 = scmp.ge.s32.totalorder %s378, 0
    // Predicated region
    $region226: #{adap_mm_forward.1} parent=1 // pred_check
      %p380 = pneg %p379
    $region227: #{adap_mm_forward.1} parent=1 // pred_check_branch
      %382 = sbr.rel (%p380) target = $region229
    $region228: #{adap_mm_forward.1} parent=1 // pred_region
      %s383 = scalar_lea.vmem [#allocation2], 6
      %s384 = scalar_lea.vmem %s6, %s378
      %s385 = scalar_lea.sflag [#allocation3], 6
      // Predicated region
      $region230: #{adap_mm_forward.1} parent=228 // pred_check
        _
      $region231: #{adap_mm_forward.1} parent=228 // pred_check_branch
        %387 = sbr.rel target = $region233
      $region232: #{adap_mm_forward.1} parent=228 // pred_region
        // Predicated region
        $region245: #{adap_mm_forward.1} parent=232 // pred_check
          _
        $region246: #{adap_mm_forward.1} parent=232 // pred_check_branch
          %403 = sbr.rel (0) target = $region248
        $region247: #{adap_mm_forward.1} parent=232 // pred_region
          %s405 = ssub.s32 2, 1
          loop: start=0, step=1, limit=1
          $region249: #{adap_mm_forward.1} parent=247 // loop_pre_header
            _
          $region250: #{adap_mm_forward.1} parent=247 // loop_header
            %s407 = sphi 0, %s411
            %p408 = scmp.ge.s32.totalorder %s407, 1
            %s412 = sphi %s383, %s383
            %s413 = sphi %s384, %s384
          $region251: #{adap_mm_forward.1} parent=247 // loop_header_branch
            %410 = sbr.rel (%p408) target = $region255
          $region252: #{adap_mm_forward.1} parent=247 // loop_body
            %v414 = vld [vmem:[%s412] sm:%s405]
            %415 = vst [vmem:[%s413] sm:%s405] %v414
          $region253: #{adap_mm_forward.1} parent=247 // loop_footer
            %s411 = sadd.s32 1, %s407
          $region254: #{adap_mm_forward.1} parent=247 // loop_footer_branch
            %406 = sbr.rel target = $region250
          $region255: #{adap_mm_forward.1} parent=247 // loop_exit
            _
        $region248: #{adap_mm_forward.1} parent=232 // pred_fallthru
          _
      $region233: #{adap_mm_forward.1} parent=228 // pred_fallthru
        _
      // Predicated region
      $region234: #{adap_mm_forward.1} parent=228 // pred_check
        _
      $region235: #{adap_mm_forward.1} parent=228 // pred_check_branch
        %389 = sbr.rel (0) target = $region237
      $region236: #{adap_mm_forward.1} parent=228 // pred_region
        %s391 = ssub.s32 2, 1
        loop: start=0, step=1, limit=1
        $region238: #{adap_mm_forward.1} parent=236 // loop_pre_header
          _
        $region239: #{adap_mm_forward.1} parent=236 // loop_header
          %s393 = sphi 0, %s397
          %p394 = scmp.ge.s32.totalorder %s393, 1
          %s398 = sphi %s383, %s383
          %s399 = sphi %s384, %s384
        $region240: #{adap_mm_forward.1} parent=236 // loop_header_branch
          %396 = sbr.rel (%p394) target = $region244
        $region241: #{adap_mm_forward.1} parent=236 // loop_body
          %v400 = vld [vmem:[%s398] sm:%s391]
          %401 = vst [vmem:[%s399] sm:%s391] %v400
        $region242: #{adap_mm_forward.1} parent=236 // loop_footer
          %s397 = sadd.s32 1, %s393
        $region243: #{adap_mm_forward.1} parent=236 // loop_footer_branch
          %392 = sbr.rel target = $region239
        $region244: #{adap_mm_forward.1} parent=236 // loop_exit
          _
      $region237: #{adap_mm_forward.1} parent=228 // pred_fallthru
        _
      // Predicated region
      $region256: #{adap_mm_forward.1} parent=228 // pred_check
        _
      $region257: #{adap_mm_forward.1} parent=228 // pred_check_branch
        %418 = sbr.rel (0) target = $region259
      $region258: #{adap_mm_forward.1} parent=228 // pred_region
        %419 = vsyncadd %s385, 16
      $region259: #{adap_mm_forward.1} parent=228 // pred_fallthru
        _
    $region229: #{adap_mm_forward.1} parent=1 // pred_fallthru
      _
    %s420 = sadd.s32 %s33, 7
    %s421 = sld [smem:[#allocation4 + %s420]]
    %p422 = scmp.ge.s32.totalorder %s421, 0
    // Predicated region
    $region260: #{adap_mm_forward.1} parent=1 // pred_check
      %p423 = pneg %p422
    $region261: #{adap_mm_forward.1} parent=1 // pred_check_branch
      %425 = sbr.rel (%p423) target = $region263
    $region262: #{adap_mm_forward.1} parent=1 // pred_region
      %s426 = scalar_lea.vmem [#allocation2], 7
      %s427 = scalar_lea.vmem %s6, %s421
      %s428 = scalar_lea.sflag [#allocation3], 7
      // Predicated region
      $region264: #{adap_mm_forward.1} parent=262 // pred_check
        _
      $region265: #{adap_mm_forward.1} parent=262 // pred_check_branch
        %430 = sbr.rel target = $region267
      $region266: #{adap_mm_forward.1} parent=262 // pred_region
        // Predicated region
        $region279: #{adap_mm_forward.1} parent=266 // pred_check
          _
        $region280: #{adap_mm_forward.1} parent=266 // pred_check_branch
          %446 = sbr.rel (0) target = $region282
        $region281: #{adap_mm_forward.1} parent=266 // pred_region
          %s448 = ssub.s32 2, 1
          loop: start=0, step=1, limit=1
          $region283: #{adap_mm_forward.1} parent=281 // loop_pre_header
            _
          $region284: #{adap_mm_forward.1} parent=281 // loop_header
            %s450 = sphi 0, %s454
            %p451 = scmp.ge.s32.totalorder %s450, 1
            %s455 = sphi %s426, %s426
            %s456 = sphi %s427, %s427
          $region285: #{adap_mm_forward.1} parent=281 // loop_header_branch
            %453 = sbr.rel (%p451) target = $region289
          $region286: #{adap_mm_forward.1} parent=281 // loop_body
            %v457 = vld [vmem:[%s455] sm:%s448]
            %458 = vst [vmem:[%s456] sm:%s448] %v457
          $region287: #{adap_mm_forward.1} parent=281 // loop_footer
            %s454 = sadd.s32 1, %s450
          $region288: #{adap_mm_forward.1} parent=281 // loop_footer_branch
            %449 = sbr.rel target = $region284
          $region289: #{adap_mm_forward.1} parent=281 // loop_exit
            _
        $region282: #{adap_mm_forward.1} parent=266 // pred_fallthru
          _
      $region267: #{adap_mm_forward.1} parent=262 // pred_fallthru
        _
      // Predicated region
      $region268: #{adap_mm_forward.1} parent=262 // pred_check
        _
      $region269: #{adap_mm_forward.1} parent=262 // pred_check_branch
        %432 = sbr.rel (0) target = $region271
      $region270: #{adap_mm_forward.1} parent=262 // pred_region
        %s434 = ssub.s32 2, 1
        loop: start=0, step=1, limit=1
        $region272: #{adap_mm_forward.1} parent=270 // loop_pre_header
          _
        $region273: #{adap_mm_forward.1} parent=270 // loop_header
          %s436 = sphi 0, %s440
          %p437 = scmp.ge.s32.totalorder %s436, 1
          %s441 = sphi %s426, %s426
          %s442 = sphi %s427, %s427
        $region274: #{adap_mm_forward.1} parent=270 // loop_header_branch
          %439 = sbr.rel (%p437) target = $region278
        $region275: #{adap_mm_forward.1} parent=270 // loop_body
          %v443 = vld [vmem:[%s441] sm:%s434]
          %444 = vst [vmem:[%s442] sm:%s434] %v443
        $region276: #{adap_mm_forward.1} parent=270 // loop_footer
          %s440 = sadd.s32 1, %s436
        $region277: #{adap_mm_forward.1} parent=270 // loop_footer_branch
          %435 = sbr.rel target = $region273
        $region278: #{adap_mm_forward.1} parent=270 // loop_exit
          _
      $region271: #{adap_mm_forward.1} parent=262 // pred_fallthru
        _
      // Predicated region
      $region290: #{adap_mm_forward.1} parent=262 // pred_check
        _
      $region291: #{adap_mm_forward.1} parent=262 // pred_check_branch
        %461 = sbr.rel (0) target = $region293
      $region292: #{adap_mm_forward.1} parent=262 // pred_region
        %462 = vsyncadd %s428, 16
      $region293: #{adap_mm_forward.1} parent=262 // pred_fallthru
        _
    $region263: #{adap_mm_forward.1} parent=1 // pred_fallthru
      _
    %s463 = sld [smem:[#allocation4 + %s33]]
    %p464 = scmp.ge.s32.totalorder %s463, 0
    // Predicated region
    $region294: #{adap_mm_forward.1} parent=1 // pred_check
      %p465 = pneg %p464
    $region295: #{adap_mm_forward.1} parent=1 // pred_check_branch
      %467 = sbr.rel (%p465) target = $region297
    $region296: #{adap_mm_forward.1} parent=1 // pred_region
      %s468 = smul.u32 1, 1
      %s469 = sshll.u32 %s468, 4
      %470 = dma.done [#allocation3], %s469
    $region297: #{adap_mm_forward.1} parent=1 // pred_fallthru
      _
    %s471 = sld [smem:[#allocation4 + %s162]]
    %p472 = scmp.ge.s32.totalorder %s471, 0
    // Predicated region
    $region298: #{adap_mm_forward.1} parent=1 // pred_check
      %p473 = pneg %p472
    $region299: #{adap_mm_forward.1} parent=1 // pred_check_branch
      %475 = sbr.rel (%p473) target = $region301
    $region300: #{adap_mm_forward.1} parent=1 // pred_region
      %s476 = scalar_lea.sflag [#allocation3], 1
      %s477 = smul.u32 1, 1
      %s478 = sshll.u32 %s477, 4
      %479 = dma.done %s476, %s478
    $region301: #{adap_mm_forward.1} parent=1 // pred_fallthru
      _
    %s480 = sld [smem:[#allocation4 + %s205]]
    %p481 = scmp.ge.s32.totalorder %s480, 0
    // Predicated region
    $region302: #{adap_mm_forward.1} parent=1 // pred_check
      %p482 = pneg %p481
    $region303: #{adap_mm_forward.1} parent=1 // pred_check_branch
      %484 = sbr.rel (%p482) target = $region305
    $region304: #{adap_mm_forward.1} parent=1 // pred_region
      %s485 = scalar_lea.sflag [#allocation3], 2
      %s486 = smul.u32 1, 1
      %s487 = sshll.u32 %s486, 4
      %488 = dma.done %s485, %s487
    $region305: #{adap_mm_forward.1} parent=1 // pred_fallthru
      _
    %s489 = sld [smem:[#allocation4 + %s248]]
    %p490 = scmp.ge.s32.totalorder %s489, 0
    // Predicated region
    $region306: #{adap_mm_forward.1} parent=1 // pred_check
      %p491 = pneg %p490
    $region307: #{adap_mm_forward.1} parent=1 // pred_check_branch
      %493 = sbr.rel (%p491) target = $region309
    $region308: #{adap_mm_forward.1} parent=1 // pred_region
      %s494 = scalar_lea.sflag [#allocation3], 3
      %s495 = smul.u32 1, 1
      %s496 = sshll.u32 %s495, 4
      %497 = dma.done %s494, %s496
    $region309: #{adap_mm_forward.1} parent=1 // pred_fallthru
      _
    %s498 = sld [smem:[#allocation4 + %s291]]
    %p499 = scmp.ge.s32.totalorder %s498, 0
    // Predicated region
    $region310: #{adap_mm_forward.1} parent=1 // pred_check
      %p500 = pneg %p499
    $region311: #{adap_mm_forward.1} parent=1 // pred_check_branch
      %502 = sbr.rel (%p500) target = $region313
    $region312: #{adap_mm_forward.1} parent=1 // pred_region
      %s503 = scalar_lea.sflag [#allocation3], 4
      %s504 = smul.u32 1, 1
      %s505 = sshll.u32 %s504, 4
      %506 = dma.done %s503, %s505
    $region313: #{adap_mm_forward.1} parent=1 // pred_fallthru
      _
    %s507 = sld [smem:[#allocation4 + %s334]]
    %p508 = scmp.ge.s32.totalorder %s507, 0
    // Predicated region
    $region314: #{adap_mm_forward.1} parent=1 // pred_check
      %p509 = pneg %p508
    $region315: #{adap_mm_forward.1} parent=1 // pred_check_branch
      %511 = sbr.rel (%p509) target = $region317
    $region316: #{adap_mm_forward.1} parent=1 // pred_region
      %s512 = scalar_lea.sflag [#allocation3], 5
      %s513 = smul.u32 1, 1
      %s514 = sshll.u32 %s513, 4
      %515 = dma.done %s512, %s514
    $region317: #{adap_mm_forward.1} parent=1 // pred_fallthru
      _
    %s516 = sld [smem:[#allocation4 + %s377]]
    %p517 = scmp.ge.s32.totalorder %s516, 0
    // Predicated region
    $region318: #{adap_mm_forward.1} parent=1 // pred_check
      %p518 = pneg %p517
    $region319: #{adap_mm_forward.1} parent=1 // pred_check_branch
      %520 = sbr.rel (%p518) target = $region321
    $region320: #{adap_mm_forward.1} parent=1 // pred_region
      %s521 = scalar_lea.sflag [#allocation3], 6
      %s522 = smul.u32 1, 1
      %s523 = sshll.u32 %s522, 4
      %524 = dma.done %s521, %s523
    $region321: #{adap_mm_forward.1} parent=1 // pred_fallthru
      _
    %s525 = sld [smem:[#allocation4 + %s420]]
    %p526 = scmp.ge.s32.totalorder %s525, 0
    // Predicated region
    $region322: #{adap_mm_forward.1} parent=1 // pred_check
      %p527 = pneg %p526
    $region323: #{adap_mm_forward.1} parent=1 // pred_check_branch
      %529 = sbr.rel (%p527) target = $region325
    $region324: #{adap_mm_forward.1} parent=1 // pred_region
      %s530 = scalar_lea.sflag [#allocation3], 7
      %s531 = smul.u32 1, 1
      %s532 = sshll.u32 %s531, 4
      %533 = dma.done %s530, %s532
    $region325: #{adap_mm_forward.1} parent=1 // pred_fallthru
      _
    // Predicated region
    $region326: #{adap_mm_forward.1} parent=1 // pred_check
      _
    $region327: #{adap_mm_forward.1} parent=1 // pred_check_branch
      %535 = sbr.rel (0) target = $region329
    $region328: #{adap_mm_forward.1} parent=1 // pred_region
      _
    $region329: #{adap_mm_forward.1} parent=1 // pred_fallthru
      _
    // Predicated region
    $region330: #{adap_mm_forward.1} parent=1 // pred_check
      _
    $region331: #{adap_mm_forward.1} parent=1 // pred_check_branch
      %537 = sbr.rel (0) target = $region333
    $region332: #{adap_mm_forward.1} parent=1 // pred_region
      _
    $region333: #{adap_mm_forward.1} parent=1 // pred_fallthru
      _
    %538 = vsyncpa [#allocation5], 1
  %539 = vsyncmov [#allocation3]
  %s540 = vpop.sfrf %539
  %p541 = scmp.eq.s32.totalorder %s540, 0
  %p542 = pneg %p541
  %544 = shalt.err (%p542)
  %s545 = scalar_lea.sflag [#allocation3], 1
  %546 = vsyncmov %s545
  %s547 = vpop.sfrf %546
  %p548 = scmp.eq.s32.totalorder %s547, 0
  %p549 = pneg %p548
  %551 = shalt.err (%p549)
  %s552 = scalar_lea.sflag [#allocation3], 2
  %553 = vsyncmov %s552
  %s554 = vpop.sfrf %553
  %p555 = scmp.eq.s32.totalorder %s554, 0
  %p556 = pneg %p555
  %558 = shalt.err (%p556)
  %s559 = scalar_lea.sflag [#allocation3], 3
  %560 = vsyncmov %s559
  %s561 = vpop.sfrf %560
  %p562 = scmp.eq.s32.totalorder %s561, 0
  %p563 = pneg %p562
  %565 = shalt.err (%p563)
  %s566 = scalar_lea.sflag [#allocation3], 4
  %567 = vsyncmov %s566
  %s568 = vpop.sfrf %567
  %p569 = scmp.eq.s32.totalorder %s568, 0
  %p570 = pneg %p569
  %572 = shalt.err (%p570)
  %s573 = scalar_lea.sflag [#allocation3], 5
  %574 = vsyncmov %s573
  %s575 = vpop.sfrf %574
  %p576 = scmp.eq.s32.totalorder %s575, 0
  %p577 = pneg %p576
  %579 = shalt.err (%p577)
  %s580 = scalar_lea.sflag [#allocation3], 6
  %581 = vsyncmov %s580
  %s582 = vpop.sfrf %581
  %p583 = scmp.eq.s32.totalorder %s582, 0
  %p584 = pneg %p583
  %586 = shalt.err (%p584)
  %s587 = scalar_lea.sflag [#allocation3], 7
  %588 = vsyncmov %s587
  %s589 = vpop.sfrf %588
  %p590 = scmp.eq.s32.totalorder %s589, 0
  %p591 = pneg %p590
  %593 = shalt.err (%p591)

</llo_original>
